<compile_context>
chip_gen: v6e
topology: v6e:2x2x1
jax: 0.10.0
libtpu: 0.0.40
codegen_flags: <defaults>
</compile_context>

<pallas_src>
import functools

import jax
import jax.numpy as jnp
from jax.experimental import pallas as pl
from jax.experimental.pallas import tpu as pltpu


def _round_up(x, m):
    return (x + m - 1) // m * m


def _leaky(x, slope=0.2):
    # slope in (0, 1) -> max(x, slope * x) == LeakyReLU(slope)
    return jnp.maximum(x, x * slope)


# ----------------------------------------------------------------------------
# Kernel 1: conv1(1x1, bias) + LeakyReLU + conv2(1x1) + BN-stat accumulation
# ----------------------------------------------------------------------------
def _stem_kernel(x_ref, w1_ref, b1_ref, w2_ref,
                 h2_ref, sum_ref, sq_ref,
                 acc_sum, acc_sq, *, m_total, tm):
    i = pl.program_id(0)

    @pl.when(i == 0)
    def _():
        acc_sum[...] = jnp.zeros_like(acc_sum)
        acc_sq[...] = jnp.zeros_like(acc_sq)

    # conv1 (1x1, bias=True) + LeakyReLU(0.2); bf16 operands, f32 accumulation
    h1 = jnp.dot(x_ref[...], w1_ref[...], preferred_element_type=jnp.float32)
    h1 = _leaky(h1 + b1_ref[...])

    # conv2 (1x1, bias=False)
    h2 = jnp.dot(h1.astype(w2_ref.dtype), w2_ref[...],
                 preferred_element_type=jnp.float32)
    h2_ref[...] = h2

    # per-channel sum / sum-of-squares for BatchNorm (mask rows past the real M)
    row = i * tm + jax.lax.broadcasted_iota(jnp.int32, h2.shape, 0)
    valid = (row < m_total).astype(jnp.float32)
    h2v = h2 * valid
    acc_sum[...] += jnp.sum(h2v, axis=0, keepdims=True)
    acc_sq[...] += jnp.sum(h2v * h2v, axis=0, keepdims=True)

    @pl.when(i == pl.num_programs(0) - 1)
    def _():
        sum_ref[...] = acc_sum[...]
        sq_ref[...] = acc_sq[...]


# ----------------------------------------------------------------------------
# Kernel 2: BatchNorm scale/shift + LeakyReLU + conv3(1x1, Cout=1)
# ----------------------------------------------------------------------------
def _head_kernel(h2_ref, scale_ref, shift_ref, w3_ref, y_ref):
    h = _leaky(h2_ref[...] * scale_ref[...] + shift_ref[...])
    # Cout == 1 -> weighted channel reduction instead of an N=1 MXU matmul.
    y_ref[...] = jnp.sum(h * w3_ref[...], axis=-1, keepdims=True)


# ----------------------------------------------------------------------------
# Forward pass (jit-able)
# ----------------------------------------------------------------------------
def pixel_discriminator_fwd(x_nchw, params, *, eps=1e-5):
    w1, b1, w2 = params["w1"], params["b1"], params["w2"]
    gamma, beta, w3 = params["gamma"], params["beta"], params["w3"]

    B, Cin, H, W = x_nchw.shape
    ndf = w1.shape[1]
    C2 = w2.shape[1]
    M = B * H * W

    # NCHW -> (M, Cin): channels land on the lane axis.
    x2d = jnp.transpose(x_nchw.astype(jnp.float32), (0, 2, 3, 1)).reshape(M, Cin)

    Cin_p = _round_up(Cin, 8)
    tm = min(1024, _round_up(M, 8))          # big row tiles -> few grid steps
    Mp = _round_up(M, tm)
    grid = (Mp // tm,)

    x_p = jnp.pad(x2d, ((0, Mp - M), (0, Cin_p - Cin))).astype(jnp.bfloat16)
    w1_p = jnp.pad(w1.astype(jnp.float32),
                   ((0, Cin_p - Cin), (0, 0))).astype(jnp.bfloat16)
    b1_r = b1.reshape(1, ndf).astype(jnp.float32)
    w2_b = w2.astype(jnp.bfloat16)

    h2, csum, csq = pl.pallas_call(
        functools.partial(_stem_kernel, m_total=M, tm=tm),
        out_shape=(jax.ShapeDtypeStruct((Mp, C2), jnp.float32),
                   jax.ShapeDtypeStruct((1, C2), jnp.float32),
                   jax.ShapeDtypeStruct((1, C2), jnp.float32)),
        grid_spec=pltpu.PrefetchScalarGridSpec(
            num_scalar_prefetch=0,
            grid=grid,
            in_specs=[pl.BlockSpec((tm, Cin_p), lambda i: (i, 0)),
                      pl.BlockSpec((Cin_p, ndf), lambda i: (0, 0)),
                      pl.BlockSpec((1, ndf), lambda i: (0, 0)),
                      pl.BlockSpec((ndf, C2), lambda i: (0, 0))],
            out_specs=[pl.BlockSpec((tm, C2), lambda i: (i, 0)),
                       pl.BlockSpec((1, C2), lambda i: (0, 0)),
                       pl.BlockSpec((1, C2), lambda i: (0, 0))],
            scratch_shapes=[pltpu.VMEM((1, C2), jnp.float32),
                            pltpu.VMEM((1, C2), jnp.float32)]),
        compiler_params=pltpu.CompilerParams(
            dimension_semantics=("arbitrary",)),   # sequential: stats accumulate
    )(x_p, w1_p, b1_r, w2_b)

    # BatchNorm2d, training mode: batch mean, biased variance (f32, 128 values).
    mean = csum / M
    var = csq / M - mean * mean
    scale = (gamma.reshape(1, C2).astype(jnp.float32)
             / jnp.sqrt(var + eps))
    shift = beta.reshape(1, C2).astype(jnp.float32) - mean * scale
    w3_r = w3.reshape(1, C2).astype(jnp.float32)

    y = pl.pallas_call(
        _head_kernel,
        out_shape=jax.ShapeDtypeStruct((Mp, 1), jnp.float32),
        grid_spec=pltpu.PrefetchScalarGridSpec(
            num_scalar_prefetch=0,
            grid=grid,
            in_specs=[pl.BlockSpec((tm, C2), lambda i: (i, 0)),
                      pl.BlockSpec((1, C2), lambda i: (0, 0)),
                      pl.BlockSpec((1, C2), lambda i: (0, 0)),
                      pl.BlockSpec((1, C2), lambda i: (0, 0))],
            out_specs=pl.BlockSpec((tm, 1), lambda i: (i, 0))),
        compiler_params=pltpu.CompilerParams(
            dimension_semantics=("parallel",)),
    )(h2, scale, shift, w3_r)

    y = y[:M].reshape(B, H, W, 1)
    return jnp.transpose(y, (0, 3, 1, 2))  # back to NCHW


# ----------------------------------------------------------------------------
# Parameter init (deterministic, synthetic; PyTorch-default gamma=1, beta=0)
# ----------------------------------------------------------------------------
def init_params(key, input_nc, ndf):
    k_w1, k_b1, k_w2, k_w3 = jax.random.split(key, 4)
    c2 = ndf * 2
    return {
        "w1": jax.random.normal(k_w1, (input_nc, ndf), jnp.float32) * 0.02,
        "b1": jax.random.normal(k_b1, (ndf,), jnp.float32) * 0.02,
        "w2": jax.random.normal(k_w2, (ndf, c2), jnp.float32) * 0.02,
        "gamma": jnp.ones((c2,), jnp.float32),
        "beta": jnp.zeros((c2,), jnp.float32),
        "w3": jax.random.normal(k_w3, (c2, 1), jnp.float32) * 0.02,
    }


# ----------------------------------------------------------------------------
if __name__ == "__main__":
    input_nc, ndf = 4, 64
    B, H, W = 2, 16, 16

    key = jax.random.PRNGKey(0)
    k_in, k_params = jax.random.split(key)
    x = jax.random.normal(k_in, (B, input_nc, H, W), jnp.float32)
    params = init_params(k_params, input_nc, ndf)

    fwd = jax.jit(pixel_discriminator_fwd)
    out = jax.block_until_ready(fwd(x, params))

    assert out.shape == (B, 1, H, W), out.shape
    assert bool(jnp.all(jnp.isfinite(out)))
    print("KERNEL_OK")
</pallas_src>

<mosaic_0001>
module attributes {stable_mosaic.version = 11 : i64} {
  func.func @_head_kernel(%arg0: i32, %arg1: memref<512x128xf32, #tpu.memory_space<vmem>>, %arg2: memref<1x128xf32, #tpu.memory_space<vmem>>, %arg3: memref<1x128xf32, #tpu.memory_space<vmem>>, %arg4: memref<1x128xf32, #tpu.memory_space<vmem>>, %arg5: memref<512x1xf32, #tpu.memory_space<vmem>>) attributes {dimension_semantics = [#tpu.dimension_semantics<parallel>], iteration_bounds = array<i64: 1>, scalar_prefetch = 0 : i64, scratch_operands = 0 : i64, tpu.core_type = #tpu.core_type<tc>, window_params = [{transform_indices = @transform_0, window_bounds = array<i64: 512, 128>}, {pipeline_mode = #tpu.pipeline_mode<synchronous>, transform_indices = @transform_1, window_bounds = array<i64: 1, 128>}, {pipeline_mode = #tpu.pipeline_mode<synchronous>, transform_indices = @transform_2, window_bounds = array<i64: 1, 128>}, {pipeline_mode = #tpu.pipeline_mode<synchronous>, transform_indices = @transform_3, window_bounds = array<i64: 1, 128>}, {transform_indices = @transform_4, window_bounds = array<i64: 512, 1>}]} {
    %c0 = arith.constant 0 : index
    %c0_0 = arith.constant 0 : index
    %0 = vector.load %arg1[%c0, %c0_0] : memref<512x128xf32, #tpu.memory_space<vmem>>, vector<512x128xf32>
    %c0_1 = arith.constant 0 : index
    %c0_2 = arith.constant 0 : index
    %1 = vector.load %arg2[%c0_1, %c0_2] : memref<1x128xf32, #tpu.memory_space<vmem>>, vector<1x128xf32>
    %2 = vector.broadcast %1 : vector<1x128xf32> to vector<512x128xf32>
    %3 = arith.mulf %0, %2 : vector<512x128xf32>
    %c0_3 = arith.constant 0 : index
    %c0_4 = arith.constant 0 : index
    %4 = vector.load %arg3[%c0_3, %c0_4] : memref<1x128xf32, #tpu.memory_space<vmem>>, vector<1x128xf32>
    %5 = vector.broadcast %4 : vector<1x128xf32> to vector<512x128xf32>
    %6 = arith.addf %3, %5 : vector<512x128xf32>
    %cst = arith.constant 2.000000e-01 : f32
    %7 = vector.broadcast %cst : f32 to vector<512x128xf32>
    %8 = arith.mulf %6, %7 : vector<512x128xf32>
    %9 = arith.maximumf %6, %8 : vector<512x128xf32>
    %c0_5 = arith.constant 0 : index
    %c0_6 = arith.constant 0 : index
    %10 = vector.load %arg4[%c0_5, %c0_6] : memref<1x128xf32, #tpu.memory_space<vmem>>, vector<1x128xf32>
    %11 = vector.broadcast %10 : vector<1x128xf32> to vector<512x128xf32>
    %12 = arith.mulf %9, %11 : vector<512x128xf32>
    %cst_7 = arith.constant dense<0.000000e+00> : vector<512xf32>
    %13 = vector.multi_reduction <add>, %12, %cst_7 [1] : vector<512x128xf32> to vector<512xf32>
    %14 = vector.shape_cast %13 : vector<512xf32> to vector<512x1xf32>
    %c0_8 = arith.constant 0 : index
    %c0_9 = arith.constant 0 : index
    %15 = vector.load %arg5[%c0_8, %c0_9] : memref<512x1xf32, #tpu.memory_space<vmem>>, vector<512x1xf32>
    tpu.vector_store %arg5[%c0_8, %c0_9], %14 {strides = array<i32>} : memref<512x1xf32, #tpu.memory_space<vmem>>, vector<512x1xf32>,
    return
  }
  func.func @transform_0(%arg0: i32) -> (i32, i32) {
    %c0_i32 = arith.constant 0 : i32
    %c0_i32_0 = arith.constant 0 : i32
    return %arg0, %c0_i32 : i32, i32
  }
  func.func @transform_1(%arg0: i32) -> (i32, i32) {
    %c0_i32 = arith.constant 0 : i32
    %c0_i32_0 = arith.constant 0 : i32
    %c0_i32_1 = arith.constant 0 : i32
    return %c0_i32, %c0_i32_0 : i32, i32
  }
  func.func @transform_2(%arg0: i32) -> (i32, i32) {
    %c0_i32 = arith.constant 0 : i32
    %c0_i32_0 = arith.constant 0 : i32
    %c0_i32_1 = arith.constant 0 : i32
    return %c0_i32, %c0_i32_0 : i32, i32
  }
  func.func @transform_3(%arg0: i32) -> (i32, i32) {
    %c0_i32 = arith.constant 0 : i32
    %c0_i32_0 = arith.constant 0 : i32
    %c0_i32_1 = arith.constant 0 : i32
    return %c0_i32, %c0_i32_0 : i32, i32
  }
  func.func @transform_4(%arg0: i32) -> (i32, i32) {
    %c0_i32 = arith.constant 0 : i32
    %c0_i32_0 = arith.constant 0 : i32
    return %arg0, %c0_i32 : i32, i32
  }
}

module attributes {stable_mosaic.version = 11 : i64} {
  func.func @_stem_kernel(%arg0: i32, %arg1: memref<512x8xbf16, #tpu.memory_space<vmem>>, %arg2: memref<8x64xbf16, #tpu.memory_space<vmem>>, %arg3: memref<1x64xf32, #tpu.memory_space<vmem>>, %arg4: memref<64x128xbf16, #tpu.memory_space<vmem>>, %arg5: memref<512x128xf32, #tpu.memory_space<vmem>>, %arg6: memref<1x128xf32, #tpu.memory_space<vmem>>, %arg7: memref<1x128xf32, #tpu.memory_space<vmem>>, %arg8: memref<1x128xf32, #tpu.memory_space<vmem>>, %arg9: memref<1x128xf32, #tpu.memory_space<vmem>>) attributes {dimension_semantics = [#tpu.dimension_semantics<arbitrary>], iteration_bounds = array<i64: 1>, scalar_prefetch = 0 : i64, scratch_operands = 2 : i64, tpu.core_type = #tpu.core_type<tc>, window_params = [{transform_indices = @transform_0, window_bounds = array<i64: 512, 8>}, {pipeline_mode = #tpu.pipeline_mode<synchronous>, transform_indices = @transform_1, window_bounds = array<i64: 8, 64>}, {pipeline_mode = #tpu.pipeline_mode<synchronous>, transform_indices = @transform_2, window_bounds = array<i64: 1, 64>}, {pipeline_mode = #tpu.pipeline_mode<synchronous>, transform_indices = @transform_3, window_bounds = array<i64: 64, 128>}, {transform_indices = @transform_4, window_bounds = array<i64: 512, 128>}, {pipeline_mode = #tpu.pipeline_mode<synchronous>, transform_indices = @transform_5, window_bounds = array<i64: 1, 128>}, {pipeline_mode = #tpu.pipeline_mode<synchronous>, transform_indices = @transform_6, window_bounds = array<i64: 1, 128>}]} {
    %c0_i32 = arith.constant 0 : i32
    %0 = arith.cmpi eq, %arg0, %c0_i32 : i32
    %1 = arith.extui %0 : i1 to i32
    %c0_i32_0 = arith.constant 0 : i32
    %2 = arith.cmpi ne, %1, %c0_i32_0 : i32
    scf.if %2 {
      %cst_25 = arith.constant 0.000000e+00 : f32
      %39 = vector.broadcast %cst_25 : f32 to vector<1x128xf32>
      %c0_26 = arith.constant 0 : index
      %c0_27 = arith.constant 0 : index
      %40 = vector.load %arg8[%c0_26, %c0_27] : memref<1x128xf32, #tpu.memory_space<vmem>>, vector<1x128xf32>
      tpu.vector_store %arg8[%c0_26, %c0_27], %39 {strides = array<i32>} : memref<1x128xf32, #tpu.memory_space<vmem>>, vector<1x128xf32>,
      %cst_28 = arith.constant 0.000000e+00 : f32
      %41 = vector.broadcast %cst_28 : f32 to vector<1x128xf32>
      %c0_29 = arith.constant 0 : index
      %c0_30 = arith.constant 0 : index
      %42 = vector.load %arg9[%c0_29, %c0_30] : memref<1x128xf32, #tpu.memory_space<vmem>>, vector<1x128xf32>
      tpu.vector_store %arg9[%c0_29, %c0_30], %41 {strides = array<i32>} : memref<1x128xf32, #tpu.memory_space<vmem>>, vector<1x128xf32>,
    } else {
    }
    %c0 = arith.constant 0 : index
    %c0_1 = arith.constant 0 : index
    %3 = vector.load %arg1[%c0, %c0_1] : memref<512x8xbf16, #tpu.memory_space<vmem>>, vector<512x8xbf16>
    %c0_2 = arith.constant 0 : index
    %c0_3 = arith.constant 0 : index
    %4 = vector.load %arg2[%c0_2, %c0_3] : memref<8x64xbf16, #tpu.memory_space<vmem>>, vector<8x64xbf16>
    %cst = arith.constant dense<0.000000e+00> : vector<512x64xf32>
    %5 = tpu.matmul %3, %4, %cst {dimension_numbers = #tpu.dot_dimension_numbers<[1], [0], [0], [1], [0, 0, 1, 1], [], []>} : vector<512x8xbf16>, vector<8x64xbf16>, vector<512x64xf32> -> vector<512x64xf32>
    %c0_4 = arith.constant 0 : index
    %c0_5 = arith.constant 0 : index
    %6 = vector.load %arg3[%c0_4, %c0_5] : memref<1x64xf32, #tpu.memory_space<vmem>>, vector<1x64xf32>
    %7 = vector.broadcast %6 : vector<1x64xf32> to vector<512x64xf32>
    %8 = arith.addf %5, %7 : vector<512x64xf32>
    %cst_6 = arith.constant 2.000000e-01 : f32
    %9 = vector.broadcast %cst_6 : f32 to vector<512x64xf32>
    %10 = arith.mulf %8, %9 : vector<512x64xf32>
    %11 = arith.maximumf %8, %10 : vector<512x64xf32>
    %12 = arith.truncf %11 : vector<512x64xf32> to vector<512x64xbf16>
    %c0_7 = arith.constant 0 : index
    %c0_8 = arith.constant 0 : index
    %13 = vector.load %arg4[%c0_7, %c0_8] : memref<64x128xbf16, #tpu.memory_space<vmem>>, vector<64x128xbf16>
    %cst_9 = arith.constant dense<0.000000e+00> : vector<512x128xf32>
    %14 = tpu.matmul %12, %13, %cst_9 {dimension_numbers = #tpu.dot_dimension_numbers<[1], [0], [0], [1], [0, 0, 1, 1], [], []>} : vector<512x64xbf16>, vector<64x128xbf16>, vector<512x128xf32> -> vector<512x128xf32>
    %c0_10 = arith.constant 0 : index
    %c0_11 = arith.constant 0 : index
    %15 = vector.load %arg5[%c0_10, %c0_11] : memref<512x128xf32, #tpu.memory_space<vmem>>, vector<512x128xf32>
    tpu.vector_store %arg5[%c0_10, %c0_11], %14 {strides = array<i32>} : memref<512x128xf32, #tpu.memory_space<vmem>>, vector<512x128xf32>,
    %c512_i32 = arith.constant 512 : i32
    %16 = arith.muli %arg0, %c512_i32 : i32
    %17 = tpu.iota {dimensions = array<i32: 0>} : vector<512x128xi32>
    %18 = vector.broadcast %16 : i32 to vector<512x128xi32>
    %19 = arith.addi %18, %17 : vector<512x128xi32>
    %c512_i32_12 = arith.constant 512 : i32
    %20 = vector.broadcast %c512_i32_12 : i32 to vector<512x128xi32>
    %21 = arith.cmpi slt, %19, %20 : vector<512x128xi32>
    %22 = arith.extui %21 : vector<512x128xi1> to vector<512x128xi32>
    %23 = arith.sitofp %22 : vector<512x128xi32> to vector<512x128xf32>
    %24 = arith.mulf %14, %23 : vector<512x128xf32>
    %c0_13 = arith.constant 0 : index
    %c0_14 = arith.constant 0 : index
    %25 = vector.load %arg8[%c0_13, %c0_14] : memref<1x128xf32, #tpu.memory_space<vmem>>, vector<1x128xf32>
    %cst_15 = arith.constant dense<0.000000e+00> : vector<128xf32>
    %26 = vector.multi_reduction <add>, %24, %cst_15 [0] : vector<512x128xf32> to vector<128xf32>
    %27 = vector.shape_cast %26 : vector<128xf32> to vector<1x128xf32>
    %28 = arith.addf %25, %27 : vector<1x128xf32>
    %c0_16 = arith.constant 0 : index
    %c0_17 = arith.constant 0 : index
    %29 = vector.load %arg8[%c0_16, %c0_17] : memref<1x128xf32, #tpu.memory_space<vmem>>, vector<1x128xf32>
    tpu.vector_store %arg8[%c0_16, %c0_17], %28 {strides = array<i32>} : memref<1x128xf32, #tpu.memory_space<vmem>>, vector<1x128xf32>,
    %c0_18 = arith.constant 0 : index
    %c0_19 = arith.constant 0 : index
    %30 = vector.load %arg9[%c0_18, %c0_19] : memref<1x128xf32, #tpu.memory_space<vmem>>, vector<1x128xf32>
    %31 = arith.mulf %24, %24 : vector<512x128xf32>
    %cst_20 = arith.constant dense<0.000000e+00> : vector<128xf32>
    %32 = vector.multi_reduction <add>, %31, %cst_20 [0] : vector<512x128xf32> to vector<128xf32>
    %33 = vector.shape_cast %32 : vector<128xf32> to vector<1x128xf32>
    %34 = arith.addf %30, %33 : vector<1x128xf32>
    %c0_21 = arith.constant 0 : index
    %c0_22 = arith.constant 0 : index
    %35 = vector.load %arg9[%c0_21, %c0_22] : memref<1x128xf32, #tpu.memory_space<vmem>>, vector<1x128xf32>
    tpu.vector_store %arg9[%c0_21, %c0_22], %34 {strides = array<i32>} : memref<1x128xf32, #tpu.memory_space<vmem>>, vector<1x128xf32>,
    %c0_i32_23 = arith.constant 0 : i32
    %36 = arith.cmpi eq, %arg0, %c0_i32_23 : i32
    %37 = arith.extui %36 : i1 to i32
    %c0_i32_24 = arith.constant 0 : i32
    %38 = arith.cmpi ne, %37, %c0_i32_24 : i32
    scf.if %38 {
      %c0_25 = arith.constant 0 : index
      %c0_26 = arith.constant 0 : index
      %39 = vector.load %arg8[%c0_25, %c0_26] : memref<1x128xf32, #tpu.memory_space<vmem>>, vector<1x128xf32>
      %c0_27 = arith.constant 0 : index
      %c0_28 = arith.constant 0 : index
      %40 = vector.load %arg6[%c0_27, %c0_28] : memref<1x128xf32, #tpu.memory_space<vmem>>, vector<1x128xf32>
      tpu.vector_store %arg6[%c0_27, %c0_28], %39 {strides = array<i32>} : memref<1x128xf32, #tpu.memory_space<vmem>>, vector<1x128xf32>,
      %c0_29 = arith.constant 0 : index
      %c0_30 = arith.constant 0 : index
      %41 = vector.load %arg9[%c0_29, %c0_30] : memref<1x128xf32, #tpu.memory_space<vmem>>, vector<1x128xf32>
      %c0_31 = arith.constant 0 : index
      %c0_32 = arith.constant 0 : index
      %42 = vector.load %arg7[%c0_31, %c0_32] : memref<1x128xf32, #tpu.memory_space<vmem>>, vector<1x128xf32>
      tpu.vector_store %arg7[%c0_31, %c0_32], %41 {strides = array<i32>} : memref<1x128xf32, #tpu.memory_space<vmem>>, vector<1x128xf32>,
    } else {
    }
    return
  }
  func.func @transform_0(%arg0: i32) -> (i32, i32) {
    %c0_i32 = arith.constant 0 : i32
    %c0_i32_0 = arith.constant 0 : i32
    return %arg0, %c0_i32 : i32, i32
  }
  func.func @transform_1(%arg0: i32) -> (i32, i32) {
    %c0_i32 = arith.constant 0 : i32
    %c0_i32_0 = arith.constant 0 : i32
    %c0_i32_1 = arith.constant 0 : i32
    return %c0_i32, %c0_i32_0 : i32, i32
  }
  func.func @transform_2(%arg0: i32) -> (i32, i32) {
    %c0_i32 = arith.constant 0 : i32
    %c0_i32_0 = arith.constant 0 : i32
    %c0_i32_1 = arith.constant 0 : i32
    return %c0_i32, %c0_i32_0 : i32, i32
  }
  func.func @transform_3(%arg0: i32) -> (i32, i32) {
    %c0_i32 = arith.constant 0 : i32
    %c0_i32_0 = arith.constant 0 : i32
    %c0_i32_1 = arith.constant 0 : i32
    return %c0_i32, %c0_i32_0 : i32, i32
  }
  func.func @transform_4(%arg0: i32) -> (i32, i32) {
    %c0_i32 = arith.constant 0 : i32
    %c0_i32_0 = arith.constant 0 : i32
    return %arg0, %c0_i32 : i32, i32
  }
  func.func @transform_5(%arg0: i32) -> (i32, i32) {
    %c0_i32 = arith.constant 0 : i32
    %c0_i32_0 = arith.constant 0 : i32
    %c0_i32_1 = arith.constant 0 : i32
    return %c0_i32, %c0_i32_0 : i32, i32
  }
  func.func @transform_6(%arg0: i32) -> (i32, i32) {
    %c0_i32 = arith.constant 0 : i32
    %c0_i32_0 = arith.constant 0 : i32
    %c0_i32_1 = arith.constant 0 : i32
    return %c0_i32, %c0_i32_0 : i32, i32
  }
}

</mosaic_0001>

<llo_original>
// kernel: pixel_discriminator_fwd.3
$region0: #{pixel_discriminator_fwd.3}
  #allocation0 [shape = 'u32[]', space=smem, size = 0x4, offset = 0x4, fixed_abs, tag = 'smem constant byte address 0x4 - core index']
  #allocation1 [shape = 'u32[144,128]{1,0:T(1,128)}', space=vmem, size = 0x12000, scoped, tag = 'internal scratch']
  %s0 = inlined_call_operand.vmem [shape: f32[512,128], index: 0, kind: input, shape index: {}]
  %s1 = inlined_call_operand.vmem [shape: f32[1,128], index: 1, kind: input, shape index: {}]
  %s2 = inlined_call_operand.vmem [shape: f32[1,128], index: 2, kind: input, shape index: {}]
  %s3 = inlined_call_operand.vmem [shape: f32[1,128], index: 3, kind: input, shape index: {}]
  %s4 = inlined_call_operand.vmem [shape: f32[512,1], index: 4, kind: output, shape index: {}]
  %s5 = sld [smem:[#allocation0]]
  $region26: #{pixel_discriminator_fwd.3} parent=0
    _
  %s7 = ssub.s32 1, %s5
  %s8 = scalar_select 0, %s7, %s5
  // Predicated region
  $region2: #{pixel_discriminator_fwd.3} parent=0 // pred_check
    _
  $region3: #{pixel_discriminator_fwd.3} parent=0 // pred_check_branch
    %10 = sbr.rel (0) target = $region5
  $region4: #{pixel_discriminator_fwd.3} parent=0 // pred_region
    _
  $region5: #{pixel_discriminator_fwd.3} parent=0 // pred_fallthru
    _
  // Predicated region
  $region6: #{pixel_discriminator_fwd.3} parent=0 // pred_check
    _
  $region7: #{pixel_discriminator_fwd.3} parent=0 // pred_check_branch
    %12 = sbr.rel (0) target = $region9
  $region8: #{pixel_discriminator_fwd.3} parent=0 // pred_region
    _
  $region9: #{pixel_discriminator_fwd.3} parent=0 // pred_fallthru
    _
  // Predicated region
  $region10: #{pixel_discriminator_fwd.3} parent=0 // pred_check
    _
  $region11: #{pixel_discriminator_fwd.3} parent=0 // pred_check_branch
    %14 = sbr.rel (0) target = $region13
  $region12: #{pixel_discriminator_fwd.3} parent=0 // pred_region
    _
  $region13: #{pixel_discriminator_fwd.3} parent=0 // pred_fallthru
    _
  // Predicated region
  $region14: #{pixel_discriminator_fwd.3} parent=0 // pred_check
    _
  $region15: #{pixel_discriminator_fwd.3} parent=0 // pred_check_branch
    %16 = sbr.rel (0) target = $region17
  $region16: #{pixel_discriminator_fwd.3} parent=0 // pred_region
    _
  $region17: #{pixel_discriminator_fwd.3} parent=0 // pred_fallthru
    _
  %v17 = vld [vmem:[%s0] sm:$0xff]
  %v18 = vld [vmem:[%s0 + $0x8] sm:$0xff]
  %v19 = vld [vmem:[%s0 + $0x10] sm:$0xff]
  %v20 = vld [vmem:[%s0 + $0x18] sm:$0xff]
  %v21 = vld [vmem:[%s0 + $0x20] sm:$0xff]
  %v22 = vld [vmem:[%s0 + $0x28] sm:$0xff]
  %v23 = vld [vmem:[%s0 + $0x30] sm:$0xff]
  %v24 = vld [vmem:[%s0 + $0x38] sm:$0xff]
  %v25 = vld [vmem:[%s0 + $0x40] sm:$0xff]
  %v26 = vld [vmem:[%s0 + $0x48] sm:$0xff]
  %v27 = vld [vmem:[%s0 + $0x50] sm:$0xff]
  %v28 = vld [vmem:[%s0 + $0x58] sm:$0xff]
  %v29 = vld [vmem:[%s0 + $0x60] sm:$0xff]
  %v30 = vld [vmem:[%s0 + $0x68] sm:$0xff]
  %v31 = vld [vmem:[%s0 + $0x70] sm:$0xff]
  %v32 = vld [vmem:[%s0 + $0x78] sm:$0xff]
  %v33 = vld [vmem:[%s0 + $0x80] sm:$0xff]
  %v34 = vld [vmem:[%s0 + $0x88] sm:$0xff]
  %v35 = vld [vmem:[%s0 + $0x90] sm:$0xff]
  %v36 = vld [vmem:[%s0 + $0x98] sm:$0xff]
  %v37 = vld [vmem:[%s0 + $0xa0] sm:$0xff]
  %v38 = vld [vmem:[%s0 + $0xa8] sm:$0xff]
  %v39 = vld [vmem:[%s0 + $0xb0] sm:$0xff]
  %v40 = vld [vmem:[%s0 + $0xb8] sm:$0xff]
  %v41 = vld [vmem:[%s0 + $0xc0] sm:$0xff]
  %v42 = vld [vmem:[%s0 + $0xc8] sm:$0xff]
  %v43 = vld [vmem:[%s0 + $0xd0] sm:$0xff]
  %v44 = vld [vmem:[%s0 + $0xd8] sm:$0xff]
  %v45 = vld [vmem:[%s0 + $0xe0] sm:$0xff]
  %v46 = vld [vmem:[%s0 + $0xe8] sm:$0xff]
  %v47 = vld [vmem:[%s0 + $0xf0] sm:$0xff]
  %v48 = vld [vmem:[%s0 + $0xf8] sm:$0xff]
  %v49 = vld [vmem:[%s0 + $0x100] sm:$0xff]
  %v50 = vld [vmem:[%s0 + $0x108] sm:$0xff]
  %v51 = vld [vmem:[%s0 + $0x110] sm:$0xff]
  %v52 = vld [vmem:[%s0 + $0x118] sm:$0xff]
  %v53 = vld [vmem:[%s0 + $0x120] sm:$0xff]
  %v54 = vld [vmem:[%s0 + $0x128] sm:$0xff]
  %v55 = vld [vmem:[%s0 + $0x130] sm:$0xff]
  %v56 = vld [vmem:[%s0 + $0x138] sm:$0xff]
  %v57 = vld [vmem:[%s0 + $0x140] sm:$0xff]
  %v58 = vld [vmem:[%s0 + $0x148] sm:$0xff]
  %v59 = vld [vmem:[%s0 + $0x150] sm:$0xff]
  %v60 = vld [vmem:[%s0 + $0x158] sm:$0xff]
  %v61 = vld [vmem:[%s0 + $0x160] sm:$0xff]
  %v62 = vld [vmem:[%s0 + $0x168] sm:$0xff]
  %v63 = vld [vmem:[%s0 + $0x170] sm:$0xff]
  %v64 = vld [vmem:[%s0 + $0x178] sm:$0xff]
  %v65 = vld [vmem:[%s0 + $0x180] sm:$0xff]
  %v66 = vld [vmem:[%s0 + $0x188] sm:$0xff]
  %v67 = vld [vmem:[%s0 + $0x190] sm:$0xff]
  %v68 = vld [vmem:[%s0 + $0x198] sm:$0xff]
  %v69 = vld [vmem:[%s0 + $0x1a0] sm:$0xff]
  %v70 = vld [vmem:[%s0 + $0x1a8] sm:$0xff]
  %v71 = vld [vmem:[%s0 + $0x1b0] sm:$0xff]
  %v72 = vld [vmem:[%s0 + $0x1b8] sm:$0xff]
  %v73 = vld [vmem:[%s0 + $0x1c0] sm:$0xff]
  %v74 = vld [vmem:[%s0 + $0x1c8] sm:$0xff]
  %v75 = vld [vmem:[%s0 + $0x1d0] sm:$0xff]
  %v76 = vld [vmem:[%s0 + $0x1d8] sm:$0xff]
  %v77 = vld [vmem:[%s0 + $0x1e0] sm:$0xff]
  %v78 = vld [vmem:[%s0 + $0x1e8] sm:$0xff]
  %v79 = vld [vmem:[%s0 + $0x1f0] sm:$0xff]
  %v80 = vld [vmem:[%s0 + $0x1f8] sm:$0xff]
  %v81 = vld [vmem:[%s1] sm:$0x1]
  %v83 = vlaneseq
  %v84 = vshrl.u32 %v83, 7
  %v85 = vsub.s32 0, %v84
  %v86 = vrot.slane %v81, %v85
  %v88 = vmul.f32 %v17, %v86
  %v89 = vmul.f32 %v18, %v86
  %v90 = vmul.f32 %v19, %v86
  %v91 = vmul.f32 %v20, %v86
  %v92 = vmul.f32 %v21, %v86
  %v93 = vmul.f32 %v22, %v86
  %v94 = vmul.f32 %v23, %v86
  %v95 = vmul.f32 %v24, %v86
  %v96 = vmul.f32 %v25, %v86
  %v97 = vmul.f32 %v26, %v86
  %v98 = vmul.f32 %v27, %v86
  %v99 = vmul.f32 %v28, %v86
  %v100 = vmul.f32 %v29, %v86
  %v101 = vmul.f32 %v30, %v86
  %v102 = vmul.f32 %v31, %v86
  %v103 = vmul.f32 %v32, %v86
  %v104 = vmul.f32 %v33, %v86
  %v105 = vmul.f32 %v34, %v86
  %v106 = vmul.f32 %v35, %v86
  %v107 = vmul.f32 %v36, %v86
  %v108 = vmul.f32 %v37, %v86
  %v109 = vmul.f32 %v38, %v86
  %v110 = vmul.f32 %v39, %v86
  %v111 = vmul.f32 %v40, %v86
  %v112 = vmul.f32 %v41, %v86
  %v113 = vmul.f32 %v42, %v86
  %v114 = vmul.f32 %v43, %v86
  %v115 = vmul.f32 %v44, %v86
  %v116 = vmul.f32 %v45, %v86
  %v117 = vmul.f32 %v46, %v86
  %v118 = vmul.f32 %v47, %v86
  %v119 = vmul.f32 %v48, %v86
  %v120 = vmul.f32 %v49, %v86
  %v121 = vmul.f32 %v50, %v86
  %v122 = vmul.f32 %v51, %v86
  %v123 = vmul.f32 %v52, %v86
  %v124 = vmul.f32 %v53, %v86
  %v125 = vmul.f32 %v54, %v86
  %v126 = vmul.f32 %v55, %v86
  %v127 = vmul.f32 %v56, %v86
  %v128 = vmul.f32 %v57, %v86
  %v129 = vmul.f32 %v58, %v86
  %v130 = vmul.f32 %v59, %v86
  %v131 = vmul.f32 %v60, %v86
  %v132 = vmul.f32 %v61, %v86
  %v133 = vmul.f32 %v62, %v86
  %v134 = vmul.f32 %v63, %v86
  %v135 = vmul.f32 %v64, %v86
  %v136 = vmul.f32 %v65, %v86
  %v137 = vmul.f32 %v66, %v86
  %v138 = vmul.f32 %v67, %v86
  %v139 = vmul.f32 %v68, %v86
  %v140 = vmul.f32 %v69, %v86
  %v141 = vmul.f32 %v70, %v86
  %v142 = vmul.f32 %v71, %v86
  %v143 = vmul.f32 %v72, %v86
  %v144 = vmul.f32 %v73, %v86
  %v145 = vmul.f32 %v74, %v86
  %v146 = vmul.f32 %v75, %v86
  %v147 = vmul.f32 %v76, %v86
  %v148 = vmul.f32 %v77, %v86
  %v149 = vmul.f32 %v78, %v86
  %v150 = vmul.f32 %v79, %v86
  %v151 = vmul.f32 %v80, %v86
  %v152 = vld [vmem:[%s2] sm:$0x1]
  %v154 = vlaneseq
  %v155 = vshrl.u32 %v154, 7
  %v156 = vsub.s32 0, %v155
  %v157 = vrot.slane %v152, %v156
  %v159 = vadd.f32 %v88, %v157
  %v160 = vadd.f32 %v89, %v157
  %v161 = vadd.f32 %v90, %v157
  %v162 = vadd.f32 %v91, %v157
  %v163 = vadd.f32 %v92, %v157
  %v164 = vadd.f32 %v93, %v157
  %v165 = vadd.f32 %v94, %v157
  %v166 = vadd.f32 %v95, %v157
  %v167 = vadd.f32 %v96, %v157
  %v168 = vadd.f32 %v97, %v157
  %v169 = vadd.f32 %v98, %v157
  %v170 = vadd.f32 %v99, %v157
  %v171 = vadd.f32 %v100, %v157
  %v172 = vadd.f32 %v101, %v157
  %v173 = vadd.f32 %v102, %v157
  %v174 = vadd.f32 %v103, %v157
  %v175 = vadd.f32 %v104, %v157
  %v176 = vadd.f32 %v105, %v157
  %v177 = vadd.f32 %v106, %v157
  %v178 = vadd.f32 %v107, %v157
  %v179 = vadd.f32 %v108, %v157
  %v180 = vadd.f32 %v109, %v157
  %v181 = vadd.f32 %v110, %v157
  %v182 = vadd.f32 %v111, %v157
  %v183 = vadd.f32 %v112, %v157
  %v184 = vadd.f32 %v113, %v157
  %v185 = vadd.f32 %v114, %v157
  %v186 = vadd.f32 %v115, %v157
  %v187 = vadd.f32 %v116, %v157
  %v188 = vadd.f32 %v117, %v157
  %v189 = vadd.f32 %v118, %v157
  %v190 = vadd.f32 %v119, %v157
  %v191 = vadd.f32 %v120, %v157
  %v192 = vadd.f32 %v121, %v157
  %v193 = vadd.f32 %v122, %v157
  %v194 = vadd.f32 %v123, %v157
  %v195 = vadd.f32 %v124, %v157
  %v196 = vadd.f32 %v125, %v157
  %v197 = vadd.f32 %v126, %v157
  %v198 = vadd.f32 %v127, %v157
  %v199 = vadd.f32 %v128, %v157
  %v200 = vadd.f32 %v129, %v157
  %v201 = vadd.f32 %v130, %v157
  %v202 = vadd.f32 %v131, %v157
  %v203 = vadd.f32 %v132, %v157
  %v204 = vadd.f32 %v133, %v157
  %v205 = vadd.f32 %v134, %v157
  %v206 = vadd.f32 %v135, %v157
  %v207 = vadd.f32 %v136, %v157
  %v208 = vadd.f32 %v137, %v157
  %v209 = vadd.f32 %v138, %v157
  %v210 = vadd.f32 %v139, %v157
  %v211 = vadd.f32 %v140, %v157
  %v212 = vadd.f32 %v141, %v157
  %v213 = vadd.f32 %v142, %v157
  %v214 = vadd.f32 %v143, %v157
  %v215 = vadd.f32 %v144, %v157
  %v216 = vadd.f32 %v145, %v157
  %v217 = vadd.f32 %v146, %v157
  %v218 = vadd.f32 %v147, %v157
  %v219 = vadd.f32 %v148, %v157
  %v220 = vadd.f32 %v149, %v157
  %v221 = vadd.f32 %v150, %v157
  %v222 = vadd.f32 %v151, %v157
  %v223 = vmul.f32 %v159, 0.2
  %v224 = vmul.f32 %v160, 0.2
  %v225 = vmul.f32 %v161, 0.2
  %v226 = vmul.f32 %v162, 0.2
  %v227 = vmul.f32 %v163, 0.2
  %v228 = vmul.f32 %v164, 0.2
  %v229 = vmul.f32 %v165, 0.2
  %v230 = vmul.f32 %v166, 0.2
  %v231 = vmul.f32 %v167, 0.2
  %v232 = vmul.f32 %v168, 0.2
  %v233 = vmul.f32 %v169, 0.2
  %v234 = vmul.f32 %v170, 0.2
  %v235 = vmul.f32 %v171, 0.2
  %v236 = vmul.f32 %v172, 0.2
  %v237 = vmul.f32 %v173, 0.2
  %v238 = vmul.f32 %v174, 0.2
  %v239 = vmul.f32 %v175, 0.2
  %v240 = vmul.f32 %v176, 0.2
  %v241 = vmul.f32 %v177, 0.2
  %v242 = vmul.f32 %v178, 0.2
  %v243 = vmul.f32 %v179, 0.2
  %v244 = vmul.f32 %v180, 0.2
  %v245 = vmul.f32 %v181, 0.2
  %v246 = vmul.f32 %v182, 0.2
  %v247 = vmul.f32 %v183, 0.2
  %v248 = vmul.f32 %v184, 0.2
  %v249 = vmul.f32 %v185, 0.2
  %v250 = vmul.f32 %v186, 0.2
  %v251 = vmul.f32 %v187, 0.2
  %v252 = vmul.f32 %v188, 0.2
  %v253 = vmul.f32 %v189, 0.2
  %v254 = vmul.f32 %v190, 0.2
  %v255 = vmul.f32 %v191, 0.2
  %v256 = vmul.f32 %v192, 0.2
  %v257 = vmul.f32 %v193, 0.2
  %v258 = vmul.f32 %v194, 0.2
  %v259 = vmul.f32 %v195, 0.2
  %v260 = vmul.f32 %v196, 0.2
  %v261 = vmul.f32 %v197, 0.2
  %v262 = vmul.f32 %v198, 0.2
  %v263 = vmul.f32 %v199, 0.2
  %v264 = vmul.f32 %v200, 0.2
  %v265 = vmul.f32 %v201, 0.2
  %v266 = vmul.f32 %v202, 0.2
  %v267 = vmul.f32 %v203, 0.2
  %v268 = vmul.f32 %v204, 0.2
  %v269 = vmul.f32 %v205, 0.2
  %v270 = vmul.f32 %v206, 0.2
  %v271 = vmul.f32 %v207, 0.2
  %v272 = vmul.f32 %v208, 0.2
  %v273 = vmul.f32 %v209, 0.2
  %v274 = vmul.f32 %v210, 0.2
  %v275 = vmul.f32 %v211, 0.2
  %v276 = vmul.f32 %v212, 0.2
  %v277 = vmul.f32 %v213, 0.2
  %v278 = vmul.f32 %v214, 0.2
  %v279 = vmul.f32 %v215, 0.2
  %v280 = vmul.f32 %v216, 0.2
  %v281 = vmul.f32 %v217, 0.2
  %v282 = vmul.f32 %v218, 0.2
  %v283 = vmul.f32 %v219, 0.2
  %v284 = vmul.f32 %v220, 0.2
  %v285 = vmul.f32 %v221, 0.2
  %v286 = vmul.f32 %v222, 0.2
  %v287 = vmax.f32 %v159, %v223
  %v288 = vmax.f32 %v160, %v224
  %v289 = vmax.f32 %v161, %v225
  %v290 = vmax.f32 %v162, %v226
  %v291 = vmax.f32 %v163, %v227
  %v292 = vmax.f32 %v164, %v228
  %v293 = vmax.f32 %v165, %v229
  %v294 = vmax.f32 %v166, %v230
  %v295 = vmax.f32 %v167, %v231
  %v296 = vmax.f32 %v168, %v232
  %v297 = vmax.f32 %v169, %v233
  %v298 = vmax.f32 %v170, %v234
  %v299 = vmax.f32 %v171, %v235
  %v300 = vmax.f32 %v172, %v236
  %v301 = vmax.f32 %v173, %v237
  %v302 = vmax.f32 %v174, %v238
  %v303 = vmax.f32 %v175, %v239
  %v304 = vmax.f32 %v176, %v240
  %v305 = vmax.f32 %v177, %v241
  %v306 = vmax.f32 %v178, %v242
  %v307 = vmax.f32 %v179, %v243
  %v308 = vmax.f32 %v180, %v244
  %v309 = vmax.f32 %v181, %v245
  %v310 = vmax.f32 %v182, %v246
  %v311 = vmax.f32 %v183, %v247
  %v312 = vmax.f32 %v184, %v248
  %v313 = vmax.f32 %v185, %v249
  %v314 = vmax.f32 %v186, %v250
  %v315 = vmax.f32 %v187, %v251
  %v316 = vmax.f32 %v188, %v252
  %v317 = vmax.f32 %v189, %v253
  %v318 = vmax.f32 %v190, %v254
  %v319 = vmax.f32 %v191, %v255
  %v320 = vmax.f32 %v192, %v256
  %v321 = vmax.f32 %v193, %v257
  %v322 = vmax.f32 %v194, %v258
  %v323 = vmax.f32 %v195, %v259
  %v324 = vmax.f32 %v196, %v260
  %v325 = vmax.f32 %v197, %v261
  %v326 = vmax.f32 %v198, %v262
  %v327 = vmax.f32 %v199, %v263
  %v328 = vmax.f32 %v200, %v264
  %v329 = vmax.f32 %v201, %v265
  %v330 = vmax.f32 %v202, %v266
  %v331 = vmax.f32 %v203, %v267
  %v332 = vmax.f32 %v204, %v268
  %v333 = vmax.f32 %v205, %v269
  %v334 = vmax.f32 %v206, %v270
  %v335 = vmax.f32 %v207, %v271
  %v336 = vmax.f32 %v208, %v272
  %v337 = vmax.f32 %v209, %v273
  %v338 = vmax.f32 %v210, %v274
  %v339 = vmax.f32 %v211, %v275
  %v340 = vmax.f32 %v212, %v276
  %v341 = vmax.f32 %v213, %v277
  %v342 = vmax.f32 %v214, %v278
  %v343 = vmax.f32 %v215, %v279
  %v344 = vmax.f32 %v216, %v280
  %v345 = vmax.f32 %v217, %v281
  %v346 = vmax.f32 %v218, %v282
  %v347 = vmax.f32 %v219, %v283
  %v348 = vmax.f32 %v220, %v284
  %v349 = vmax.f32 %v221, %v285
  %v350 = vmax.f32 %v222, %v286
  %v351 = vld [vmem:[%s3] sm:$0x1]
  %v353 = vlaneseq
  %v354 = vshrl.u32 %v353, 7
  %v355 = vsub.s32 0, %v354
  %v356 = vrot.slane %v351, %v355
  %v358 = vmul.f32 %v287, %v356
  %v359 = vmul.f32 %v288, %v356
  %v360 = vmul.f32 %v289, %v356
  %v361 = vmul.f32 %v290, %v356
  %v362 = vmul.f32 %v291, %v356
  %v363 = vmul.f32 %v292, %v356
  %v364 = vmul.f32 %v293, %v356
  %v365 = vmul.f32 %v294, %v356
  %v366 = vmul.f32 %v295, %v356
  %v367 = vmul.f32 %v296, %v356
  %v368 = vmul.f32 %v297, %v356
  %v369 = vmul.f32 %v298, %v356
  %v370 = vmul.f32 %v299, %v356
  %v371 = vmul.f32 %v300, %v356
  %v372 = vmul.f32 %v301, %v356
  %v373 = vmul.f32 %v302, %v356
  %v374 = vmul.f32 %v303, %v356
  %v375 = vmul.f32 %v304, %v356
  %v376 = vmul.f32 %v305, %v356
  %v377 = vmul.f32 %v306, %v356
  %v378 = vmul.f32 %v307, %v356
  %v379 = vmul.f32 %v308, %v356
  %v380 = vmul.f32 %v309, %v356
  %v381 = vmul.f32 %v310, %v356
  %v382 = vmul.f32 %v311, %v356
  %v383 = vmul.f32 %v312, %v356
  %v384 = vmul.f32 %v313, %v356
  %v385 = vmul.f32 %v314, %v356
  %v386 = vmul.f32 %v315, %v356
  %v387 = vmul.f32 %v316, %v356
  %v388 = vmul.f32 %v317, %v356
  %v389 = vmul.f32 %v318, %v356
  %v390 = vmul.f32 %v319, %v356
  %v391 = vmul.f32 %v320, %v356
  %v392 = vmul.f32 %v321, %v356
  %v393 = vmul.f32 %v322, %v356
  %v394 = vmul.f32 %v323, %v356
  %v395 = vmul.f32 %v324, %v356
  %v396 = vmul.f32 %v325, %v356
  %v397 = vmul.f32 %v326, %v356
  %v398 = vmul.f32 %v327, %v356
  %v399 = vmul.f32 %v328, %v356
  %v400 = vmul.f32 %v329, %v356
  %v401 = vmul.f32 %v330, %v356
  %v402 = vmul.f32 %v331, %v356
  %v403 = vmul.f32 %v332, %v356
  %v404 = vmul.f32 %v333, %v356
  %v405 = vmul.f32 %v334, %v356
  %v406 = vmul.f32 %v335, %v356
  %v407 = vmul.f32 %v336, %v356
  %v408 = vmul.f32 %v337, %v356
  %v409 = vmul.f32 %v338, %v356
  %v410 = vmul.f32 %v339, %v356
  %v411 = vmul.f32 %v340, %v356
  %v412 = vmul.f32 %v341, %v356
  %v413 = vmul.f32 %v342, %v356
  %v414 = vmul.f32 %v343, %v356
  %v415 = vmul.f32 %v344, %v356
  %v416 = vmul.f32 %v345, %v356
  %v417 = vmul.f32 %v346, %v356
  %v418 = vmul.f32 %v347, %v356
  %v419 = vmul.f32 %v348, %v356
  %v420 = vmul.f32 %v349, %v356
  %v421 = vmul.f32 %v350, %v356
  %422 = vadd.xlane.f32.xlu0 %v358
  %v423 = vpop.xlane.xlu0 %422
  %424 = vadd.xlane.f32.xlu0 %v359
  %v425 = vpop.xlane.xlu0 %424
  %426 = vadd.xlane.f32.xlu0 %v360
  %v427 = vpop.xlane.xlu0 %426
  %428 = vadd.xlane.f32.xlu0 %v361
  %v429 = vpop.xlane.xlu0 %428
  %430 = vadd.xlane.f32.xlu0 %v362
  %v431 = vpop.xlane.xlu0 %430
  %432 = vadd.xlane.f32.xlu0 %v363
  %v433 = vpop.xlane.xlu0 %432
  %434 = vadd.xlane.f32.xlu0 %v364
  %v435 = vpop.xlane.xlu0 %434
  %436 = vadd.xlane.f32.xlu0 %v365
  %v437 = vpop.xlane.xlu0 %436
  %438 = vadd.xlane.f32.xlu0 %v366
  %v439 = vpop.xlane.xlu0 %438
  %440 = vadd.xlane.f32.xlu0 %v367
  %v441 = vpop.xlane.xlu0 %440
  %442 = vadd.xlane.f32.xlu0 %v368
  %v443 = vpop.xlane.xlu0 %442
  %444 = vadd.xlane.f32.xlu0 %v369
  %v445 = vpop.xlane.xlu0 %444
  %446 = vadd.xlane.f32.xlu0 %v370
  %v447 = vpop.xlane.xlu0 %446
  %448 = vadd.xlane.f32.xlu0 %v371
  %v449 = vpop.xlane.xlu0 %448
  %450 = vadd.xlane.f32.xlu0 %v372
  %v451 = vpop.xlane.xlu0 %450
  %452 = vadd.xlane.f32.xlu0 %v373
  %v453 = vpop.xlane.xlu0 %452
  %454 = vadd.xlane.f32.xlu0 %v374
  %v455 = vpop.xlane.xlu0 %454
  %456 = vadd.xlane.f32.xlu0 %v375
  %v457 = vpop.xlane.xlu0 %456
  %458 = vadd.xlane.f32.xlu0 %v376
  %v459 = vpop.xlane.xlu0 %458
  %460 = vadd.xlane.f32.xlu0 %v377
  %v461 = vpop.xlane.xlu0 %460
  %462 = vadd.xlane.f32.xlu0 %v378
  %v463 = vpop.xlane.xlu0 %462
  %464 = vadd.xlane.f32.xlu0 %v379
  %v465 = vpop.xlane.xlu0 %464
  %466 = vadd.xlane.f32.xlu0 %v380
  %v467 = vpop.xlane.xlu0 %466
  %468 = vadd.xlane.f32.xlu0 %v381
  %v469 = vpop.xlane.xlu0 %468
  %470 = vadd.xlane.f32.xlu0 %v382
  %v471 = vpop.xlane.xlu0 %470
  %472 = vadd.xlane.f32.xlu0 %v383
  %v473 = vpop.xlane.xlu0 %472
  %474 = vadd.xlane.f32.xlu0 %v384
  %v475 = vpop.xlane.xlu0 %474
  %476 = vadd.xlane.f32.xlu0 %v385
  %v477 = vpop.xlane.xlu0 %476
  %478 = vadd.xlane.f32.xlu0 %v386
  %v479 = vpop.xlane.xlu0 %478
  %480 = vadd.xlane.f32.xlu0 %v387
  %v481 = vpop.xlane.xlu0 %480
  %482 = vadd.xlane.f32.xlu0 %v388
  %v483 = vpop.xlane.xlu0 %482
  %484 = vadd.xlane.f32.xlu0 %v389
  %v485 = vpop.xlane.xlu0 %484
  %486 = vadd.xlane.f32.xlu0 %v390
  %v487 = vpop.xlane.xlu0 %486
  %488 = vadd.xlane.f32.xlu0 %v391
  %v489 = vpop.xlane.xlu0 %488
  %490 = vadd.xlane.f32.xlu0 %v392
  %v491 = vpop.xlane.xlu0 %490
  %492 = vadd.xlane.f32.xlu0 %v393
  %v493 = vpop.xlane.xlu0 %492
  %494 = vadd.xlane.f32.xlu0 %v394
  %v495 = vpop.xlane.xlu0 %494
  %496 = vadd.xlane.f32.xlu0 %v395
  %v497 = vpop.xlane.xlu0 %496
  %498 = vadd.xlane.f32.xlu0 %v396
  %v499 = vpop.xlane.xlu0 %498
  %500 = vadd.xlane.f32.xlu0 %v397
  %v501 = vpop.xlane.xlu0 %500
  %502 = vadd.xlane.f32.xlu0 %v398
  %v503 = vpop.xlane.xlu0 %502
  %504 = vadd.xlane.f32.xlu0 %v399
  %v505 = vpop.xlane.xlu0 %504
  %506 = vadd.xlane.f32.xlu0 %v400
  %v507 = vpop.xlane.xlu0 %506
  %508 = vadd.xlane.f32.xlu0 %v401
  %v509 = vpop.xlane.xlu0 %508
  %510 = vadd.xlane.f32.xlu0 %v402
  %v511 = vpop.xlane.xlu0 %510
  %512 = vadd.xlane.f32.xlu0 %v403
  %v513 = vpop.xlane.xlu0 %512
  %514 = vadd.xlane.f32.xlu0 %v404
  %v515 = vpop.xlane.xlu0 %514
  %516 = vadd.xlane.f32.xlu0 %v405
  %v517 = vpop.xlane.xlu0 %516
  %518 = vadd.xlane.f32.xlu0 %v406
  %v519 = vpop.xlane.xlu0 %518
  %520 = vadd.xlane.f32.xlu0 %v407
  %v521 = vpop.xlane.xlu0 %520
  %522 = vadd.xlane.f32.xlu0 %v408
  %v523 = vpop.xlane.xlu0 %522
  %524 = vadd.xlane.f32.xlu0 %v409
  %v525 = vpop.xlane.xlu0 %524
  %526 = vadd.xlane.f32.xlu0 %v410
  %v527 = vpop.xlane.xlu0 %526
  %528 = vadd.xlane.f32.xlu0 %v411
  %v529 = vpop.xlane.xlu0 %528
  %530 = vadd.xlane.f32.xlu0 %v412
  %v531 = vpop.xlane.xlu0 %530
  %532 = vadd.xlane.f32.xlu0 %v413
  %v533 = vpop.xlane.xlu0 %532
  %534 = vadd.xlane.f32.xlu0 %v414
  %v535 = vpop.xlane.xlu0 %534
  %536 = vadd.xlane.f32.xlu0 %v415
  %v537 = vpop.xlane.xlu0 %536
  %538 = vadd.xlane.f32.xlu0 %v416
  %v539 = vpop.xlane.xlu0 %538
  %540 = vadd.xlane.f32.xlu0 %v417
  %v541 = vpop.xlane.xlu0 %540
  %542 = vadd.xlane.f32.xlu0 %v418
  %v543 = vpop.xlane.xlu0 %542
  %544 = vadd.xlane.f32.xlu0 %v419
  %v545 = vpop.xlane.xlu0 %544
  %546 = vadd.xlane.f32.xlu0 %v420
  %v547 = vpop.xlane.xlu0 %546
  %548 = vadd.xlane.f32.xlu0 %v421
  %v549 = vpop.xlane.xlu0 %548
  %vm550 = vcmask 7168
  %551 = vst.msk [vmem:[%s4] sm:$0xff] %vm550, %v423
  %552 = vst.msk [vmem:[%s4 + $0x8] sm:$0xff] %vm550, %v425
  %553 = vst.msk [vmem:[%s4 + $0x10] sm:$0xff] %vm550, %v427
  %554 = vst.msk [vmem:[%s4 + $0x18] sm:$0xff] %vm550, %v429
  %555 = vst.msk [vmem:[%s4 + $0x20] sm:$0xff] %vm550, %v431
  %556 = vst.msk [vmem:[%s4 + $0x28] sm:$0xff] %vm550, %v433
  %557 = vst.msk [vmem:[%s4 + $0x30] sm:$0xff] %vm550, %v435
  %558 = vst.msk [vmem:[%s4 + $0x38] sm:$0xff] %vm550, %v437
  %559 = vst.msk [vmem:[%s4 + $0x40] sm:$0xff] %vm550, %v439
  %560 = vst.msk [vmem:[%s4 + $0x48] sm:$0xff] %vm550, %v441
  %561 = vst.msk [vmem:[%s4 + $0x50] sm:$0xff] %vm550, %v443
  %562 = vst.msk [vmem:[%s4 + $0x58] sm:$0xff] %vm550, %v445
  %563 = vst.msk [vmem:[%s4 + $0x60] sm:$0xff] %vm550, %v447
  %564 = vst.msk [vmem:[%s4 + $0x68] sm:$0xff] %vm550, %v449
  %565 = vst.msk [vmem:[%s4 + $0x70] sm:$0xff] %vm550, %v451
  %566 = vst.msk [vmem:[%s4 + $0x78] sm:$0xff] %vm550, %v453
  %567 = vst.msk [vmem:[%s4 + $0x80] sm:$0xff] %vm550, %v455
  %568 = vst.msk [vmem:[%s4 + $0x88] sm:$0xff] %vm550, %v457
  %569 = vst.msk [vmem:[%s4 + $0x90] sm:$0xff] %vm550, %v459
  %570 = vst.msk [vmem:[%s4 + $0x98] sm:$0xff] %vm550, %v461
  %571 = vst.msk [vmem:[%s4 + $0xa0] sm:$0xff] %vm550, %v463
  %572 = vst.msk [vmem:[%s4 + $0xa8] sm:$0xff] %vm550, %v465
  %573 = vst.msk [vmem:[%s4 + $0xb0] sm:$0xff] %vm550, %v467
  %574 = vst.msk [vmem:[%s4 + $0xb8] sm:$0xff] %vm550, %v469
  %575 = vst.msk [vmem:[%s4 + $0xc0] sm:$0xff] %vm550, %v471
  %576 = vst.msk [vmem:[%s4 + $0xc8] sm:$0xff] %vm550, %v473
  %577 = vst.msk [vmem:[%s4 + $0xd0] sm:$0xff] %vm550, %v475
  %578 = vst.msk [vmem:[%s4 + $0xd8] sm:$0xff] %vm550, %v477
  %579 = vst.msk [vmem:[%s4 + $0xe0] sm:$0xff] %vm550, %v479
  %580 = vst.msk [vmem:[%s4 + $0xe8] sm:$0xff] %vm550, %v481
  %581 = vst.msk [vmem:[%s4 + $0xf0] sm:$0xff] %vm550, %v483
  %582 = vst.msk [vmem:[%s4 + $0xf8] sm:$0xff] %vm550, %v485
  %583 = vst.msk [vmem:[%s4 + $0x100] sm:$0xff] %vm550, %v487
  %584 = vst.msk [vmem:[%s4 + $0x108] sm:$0xff] %vm550, %v489
  %585 = vst.msk [vmem:[%s4 + $0x110] sm:$0xff] %vm550, %v491
  %586 = vst.msk [vmem:[%s4 + $0x118] sm:$0xff] %vm550, %v493
  %587 = vst.msk [vmem:[%s4 + $0x120] sm:$0xff] %vm550, %v495
  %588 = vst.msk [vmem:[%s4 + $0x128] sm:$0xff] %vm550, %v497
  %589 = vst.msk [vmem:[%s4 + $0x130] sm:$0xff] %vm550, %v499
  %590 = vst.msk [vmem:[%s4 + $0x138] sm:$0xff] %vm550, %v501
  %591 = vst.msk [vmem:[%s4 + $0x140] sm:$0xff] %vm550, %v503
  %592 = vst.msk [vmem:[%s4 + $0x148] sm:$0xff] %vm550, %v505
  %593 = vst.msk [vmem:[%s4 + $0x150] sm:$0xff] %vm550, %v507
  %594 = vst.msk [vmem:[%s4 + $0x158] sm:$0xff] %vm550, %v509
  %595 = vst.msk [vmem:[%s4 + $0x160] sm:$0xff] %vm550, %v511
  %596 = vst.msk [vmem:[%s4 + $0x168] sm:$0xff] %vm550, %v513
  %597 = vst.msk [vmem:[%s4 + $0x170] sm:$0xff] %vm550, %v515
  %598 = vst.msk [vmem:[%s4 + $0x178] sm:$0xff] %vm550, %v517
  %599 = vst.msk [vmem:[%s4 + $0x180] sm:$0xff] %vm550, %v519
  %600 = vst.msk [vmem:[%s4 + $0x188] sm:$0xff] %vm550, %v521
  %601 = vst.msk [vmem:[%s4 + $0x190] sm:$0xff] %vm550, %v523
  %602 = vst.msk [vmem:[%s4 + $0x198] sm:$0xff] %vm550, %v525
  %603 = vst.msk [vmem:[%s4 + $0x1a0] sm:$0xff] %vm550, %v527
  %604 = vst.msk [vmem:[%s4 + $0x1a8] sm:$0xff] %vm550, %v529
  %605 = vst.msk [vmem:[%s4 + $0x1b0] sm:$0xff] %vm550, %v531
  %606 = vst.msk [vmem:[%s4 + $0x1b8] sm:$0xff] %vm550, %v533
  %607 = vst.msk [vmem:[%s4 + $0x1c0] sm:$0xff] %vm550, %v535
  %608 = vst.msk [vmem:[%s4 + $0x1c8] sm:$0xff] %vm550, %v537
  %609 = vst.msk [vmem:[%s4 + $0x1d0] sm:$0xff] %vm550, %v539
  %610 = vst.msk [vmem:[%s4 + $0x1d8] sm:$0xff] %vm550, %v541
  %611 = vst.msk [vmem:[%s4 + $0x1e0] sm:$0xff] %vm550, %v543
  %612 = vst.msk [vmem:[%s4 + $0x1e8] sm:$0xff] %vm550, %v545
  %613 = vst.msk [vmem:[%s4 + $0x1f0] sm:$0xff] %vm550, %v547
  %614 = vst.msk [vmem:[%s4 + $0x1f8] sm:$0xff] %vm550, %v549
  // Predicated region
  $region18: #{pixel_discriminator_fwd.3} parent=0 // pred_check
    _
  $region19: #{pixel_discriminator_fwd.3} parent=0 // pred_check_branch
    %616 = sbr.rel (0) target = $region21
  $region20: #{pixel_discriminator_fwd.3} parent=0 // pred_region
    _
  $region21: #{pixel_discriminator_fwd.3} parent=0 // pred_fallthru
    _
  // Predicated region
  $region22: #{pixel_discriminator_fwd.3} parent=0 // pred_check
    _
  $region23: #{pixel_discriminator_fwd.3} parent=0 // pred_check_branch
    %618 = sbr.rel (0) target = $region25
  $region24: #{pixel_discriminator_fwd.3} parent=0 // pred_region
    _
  $region25: #{pixel_discriminator_fwd.3} parent=0 // pred_fallthru
    _

// kernel: pixel_discriminator_fwd.2
$region0: #{pixel_discriminator_fwd.2}
  #allocation0 [shape = 'u32[]', space=smem, size = 0x4, offset = 0x4, fixed_abs, tag = 'smem constant byte address 0x4 - core index']
  #allocation1 [shape = 'u32[144,128]{1,0:T(1,128)}', space=vmem, size = 0x12000, scoped, tag = 'internal scratch']
  #allocation2 [shape = 'f32[1,128]{1,0:T(1,128)}', space=vmem, size = 0x200, scoped, tag = 'scratch operand']
  #allocation3 [shape = 'f32[1,128]{1,0:T(1,128)}', space=vmem, size = 0x200, scoped, tag = 'scratch operand']
  %s0 = inlined_call_operand.vmem [shape: bf16[512,8], index: 0, kind: input, shape index: {}]
  %s1 = inlined_call_operand.vmem [shape: bf16[8,64], index: 1, kind: input, shape index: {}]
  %s2 = inlined_call_operand.vmem [shape: f32[1,64], index: 2, kind: input, shape index: {}]
  %s3 = inlined_call_operand.vmem [shape: bf16[64,128], index: 3, kind: input, shape index: {}]
  %s4 = inlined_call_operand.vmem [shape: f32[512,128], index: 4, kind: output, shape index: {0}]
  %s5 = inlined_call_operand.vmem [shape: f32[1,128], index: 5, kind: output, shape index: {1}]
  %s6 = inlined_call_operand.vmem [shape: f32[1,128], index: 6, kind: output, shape index: {2}]
  %7 = xla_tuple %s4, %s5, %s6
  %s8 = sld [smem:[#allocation0]]
  $region50: #{pixel_discriminator_fwd.2} parent=0
    _
  %s10 = ssub.s32 1, %s8
  %s11 = scalar_select 0, %s10, %s8
  // Predicated region
  $region2: #{pixel_discriminator_fwd.2} parent=0 // pred_check
    _
  $region3: #{pixel_discriminator_fwd.2} parent=0 // pred_check_branch
    %13 = sbr.rel (0) target = $region5
  $region4: #{pixel_discriminator_fwd.2} parent=0 // pred_region
    _
  $region5: #{pixel_discriminator_fwd.2} parent=0 // pred_fallthru
    _
  // Predicated region
  $region6: #{pixel_discriminator_fwd.2} parent=0 // pred_check
    _
  $region7: #{pixel_discriminator_fwd.2} parent=0 // pred_check_branch
    %15 = sbr.rel (0) target = $region9
  $region8: #{pixel_discriminator_fwd.2} parent=0 // pred_region
    _
  $region9: #{pixel_discriminator_fwd.2} parent=0 // pred_fallthru
    _
  // Predicated region
  $region10: #{pixel_discriminator_fwd.2} parent=0 // pred_check
    _
  $region11: #{pixel_discriminator_fwd.2} parent=0 // pred_check_branch
    %17 = sbr.rel (0) target = $region13
  $region12: #{pixel_discriminator_fwd.2} parent=0 // pred_region
    _
  $region13: #{pixel_discriminator_fwd.2} parent=0 // pred_fallthru
    _
  // Predicated region
  $region14: #{pixel_discriminator_fwd.2} parent=0 // pred_check
    _
  $region15: #{pixel_discriminator_fwd.2} parent=0 // pred_check_branch
    %19 = sbr.rel (0) target = $region17
  $region16: #{pixel_discriminator_fwd.2} parent=0 // pred_region
    _
  $region17: #{pixel_discriminator_fwd.2} parent=0 // pred_fallthru
    _
  %p21 = scmp.eq.s32.totalorder 0, 0
  // Predicated region
  $region18: #{pixel_discriminator_fwd.2} parent=0 // pred_check
    %p22 = pneg %p21
  $region19: #{pixel_discriminator_fwd.2} parent=0 // pred_check_branch
    %24 = sbr.rel (%p22) target = $region21
  $region20: #{pixel_discriminator_fwd.2} parent=0 // pred_region
    %25 = vst [vmem:[#allocation2] sm:$0x1] 0.0
    %26 = vst [vmem:[#allocation3] sm:$0x1] 0.0
  $region21: #{pixel_discriminator_fwd.2} parent=0 // pred_fallthru
    _
  %v27 = vld [vmem:[%s0] sm:$0xf]
  %v28 = vld [vmem:[%s0 + $0x4] sm:$0xf]
  %v29 = vld [vmem:[%s0 + $0x8] sm:$0xf]
  %v30 = vld [vmem:[%s0 + $0xc] sm:$0xf]
  %v31 = vld [vmem:[%s0 + $0x10] sm:$0xf]
  %v32 = vld [vmem:[%s0 + $0x14] sm:$0xf]
  %v33 = vld [vmem:[%s0 + $0x18] sm:$0xf]
  %v34 = vld [vmem:[%s0 + $0x1c] sm:$0xf]
  %v35 = vld [vmem:[%s0 + $0x20] sm:$0xf]
  %v36 = vld [vmem:[%s0 + $0x24] sm:$0xf]
  %v37 = vld [vmem:[%s0 + $0x28] sm:$0xf]
  %v38 = vld [vmem:[%s0 + $0x2c] sm:$0xf]
  %v39 = vld [vmem:[%s0 + $0x30] sm:$0xf]
  %v40 = vld [vmem:[%s0 + $0x34] sm:$0xf]
  %v41 = vld [vmem:[%s0 + $0x38] sm:$0xf]
  %v42 = vld [vmem:[%s0 + $0x3c] sm:$0xf]
  %v43 = vld [vmem:[%s0 + $0x40] sm:$0xf]
  %v44 = vld [vmem:[%s0 + $0x44] sm:$0xf]
  %v45 = vld [vmem:[%s0 + $0x48] sm:$0xf]
  %v46 = vld [vmem:[%s0 + $0x4c] sm:$0xf]
  %v47 = vld [vmem:[%s0 + $0x50] sm:$0xf]
  %v48 = vld [vmem:[%s0 + $0x54] sm:$0xf]
  %v49 = vld [vmem:[%s0 + $0x58] sm:$0xf]
  %v50 = vld [vmem:[%s0 + $0x5c] sm:$0xf]
  %v51 = vld [vmem:[%s0 + $0x60] sm:$0xf]
  %v52 = vld [vmem:[%s0 + $0x64] sm:$0xf]
  %v53 = vld [vmem:[%s0 + $0x68] sm:$0xf]
  %v54 = vld [vmem:[%s0 + $0x6c] sm:$0xf]
  %v55 = vld [vmem:[%s0 + $0x70] sm:$0xf]
  %v56 = vld [vmem:[%s0 + $0x74] sm:$0xf]
  %v57 = vld [vmem:[%s0 + $0x78] sm:$0xf]
  %v58 = vld [vmem:[%s0 + $0x7c] sm:$0xf]
  %v59 = vld [vmem:[%s0 + $0x80] sm:$0xf]
  %v60 = vld [vmem:[%s0 + $0x84] sm:$0xf]
  %v61 = vld [vmem:[%s0 + $0x88] sm:$0xf]
  %v62 = vld [vmem:[%s0 + $0x8c] sm:$0xf]
  %v63 = vld [vmem:[%s0 + $0x90] sm:$0xf]
  %v64 = vld [vmem:[%s0 + $0x94] sm:$0xf]
  %v65 = vld [vmem:[%s0 + $0x98] sm:$0xf]
  %v66 = vld [vmem:[%s0 + $0x9c] sm:$0xf]
  %v67 = vld [vmem:[%s0 + $0xa0] sm:$0xf]
  %v68 = vld [vmem:[%s0 + $0xa4] sm:$0xf]
  %v69 = vld [vmem:[%s0 + $0xa8] sm:$0xf]
  %v70 = vld [vmem:[%s0 + $0xac] sm:$0xf]
  %v71 = vld [vmem:[%s0 + $0xb0] sm:$0xf]
  %v72 = vld [vmem:[%s0 + $0xb4] sm:$0xf]
  %v73 = vld [vmem:[%s0 + $0xb8] sm:$0xf]
  %v74 = vld [vmem:[%s0 + $0xbc] sm:$0xf]
  %v75 = vld [vmem:[%s0 + $0xc0] sm:$0xf]
  %v76 = vld [vmem:[%s0 + $0xc4] sm:$0xf]
  %v77 = vld [vmem:[%s0 + $0xc8] sm:$0xf]
  %v78 = vld [vmem:[%s0 + $0xcc] sm:$0xf]
  %v79 = vld [vmem:[%s0 + $0xd0] sm:$0xf]
  %v80 = vld [vmem:[%s0 + $0xd4] sm:$0xf]
  %v81 = vld [vmem:[%s0 + $0xd8] sm:$0xf]
  %v82 = vld [vmem:[%s0 + $0xdc] sm:$0xf]
  %v83 = vld [vmem:[%s0 + $0xe0] sm:$0xf]
  %v84 = vld [vmem:[%s0 + $0xe4] sm:$0xf]
  %v85 = vld [vmem:[%s0 + $0xe8] sm:$0xf]
  %v86 = vld [vmem:[%s0 + $0xec] sm:$0xf]
  %v87 = vld [vmem:[%s0 + $0xf0] sm:$0xf]
  %v88 = vld [vmem:[%s0 + $0xf4] sm:$0xf]
  %v89 = vld [vmem:[%s0 + $0xf8] sm:$0xf]
  %v90 = vld [vmem:[%s0 + $0xfc] sm:$0xf]
  %v91 = vld [vmem:[%s1] sm:$0xf]
  %v92 = vld [vmem:[%s2] sm:$0x1]
  %v94 = vlaneseq
  %v95 = vshrl.u32 %v94, 7
  %v96 = vsub.s32 0, %v95
  %v97 = vrot.slane %v92, %v96
  %v163 = vunpack.c.l.b16 %v27
  %v164 = vunpack.c.l.b16 %v28
  %v165 = vunpack.c.l.b16 %v29
  %v166 = vunpack.c.l.b16 %v30
  %v167 = vunpack.c.l.b16 %v31
  %v168 = vunpack.c.l.b16 %v32
  %v169 = vunpack.c.l.b16 %v33
  %v170 = vunpack.c.l.b16 %v34
  %v171 = vunpack.c.l.b16 %v35
  %v172 = vunpack.c.l.b16 %v36
  %v173 = vunpack.c.l.b16 %v37
  %v174 = vunpack.c.l.b16 %v38
  %v175 = vunpack.c.l.b16 %v39
  %v176 = vunpack.c.l.b16 %v40
  %v177 = vunpack.c.l.b16 %v41
  %v178 = vunpack.c.l.b16 %v42
  %v179 = vunpack.c.l.b16 %v43
  %v180 = vunpack.c.l.b16 %v44
  %v181 = vunpack.c.l.b16 %v45
  %v182 = vunpack.c.l.b16 %v46
  %v183 = vunpack.c.l.b16 %v47
  %v184 = vunpack.c.l.b16 %v48
  %v185 = vunpack.c.l.b16 %v49
  %v186 = vunpack.c.l.b16 %v50
  %v187 = vunpack.c.l.b16 %v51
  %v188 = vunpack.c.l.b16 %v52
  %v189 = vunpack.c.l.b16 %v53
  %v190 = vunpack.c.l.b16 %v54
  %v191 = vunpack.c.l.b16 %v55
  %v192 = vunpack.c.l.b16 %v56
  %v193 = vunpack.c.l.b16 %v57
  %v194 = vunpack.c.l.b16 %v58
  %v195 = vunpack.c.l.b16 %v59
  %v196 = vunpack.c.l.b16 %v60
  %v197 = vunpack.c.l.b16 %v61
  %v198 = vunpack.c.l.b16 %v62
  %v199 = vunpack.c.l.b16 %v63
  %v200 = vunpack.c.l.b16 %v64
  %v201 = vunpack.c.l.b16 %v65
  %v202 = vunpack.c.l.b16 %v66
  %v203 = vunpack.c.l.b16 %v67
  %v204 = vunpack.c.l.b16 %v68
  %v205 = vunpack.c.l.b16 %v69
  %v206 = vunpack.c.l.b16 %v70
  %v207 = vunpack.c.l.b16 %v71
  %v208 = vunpack.c.l.b16 %v72
  %v209 = vunpack.c.l.b16 %v73
  %v210 = vunpack.c.l.b16 %v74
  %v211 = vunpack.c.l.b16 %v75
  %v212 = vunpack.c.l.b16 %v76
  %v213 = vunpack.c.l.b16 %v77
  %v214 = vunpack.c.l.b16 %v78
  %v215 = vunpack.c.l.b16 %v79
  %v216 = vunpack.c.l.b16 %v80
  %v217 = vunpack.c.l.b16 %v81
  %v218 = vunpack.c.l.b16 %v82
  %v219 = vunpack.c.l.b16 %v83
  %v220 = vunpack.c.l.b16 %v84
  %v221 = vunpack.c.l.b16 %v85
  %v222 = vunpack.c.l.b16 %v86
  %v223 = vunpack.c.l.b16 %v87
  %v224 = vunpack.c.l.b16 %v88
  %v225 = vunpack.c.l.b16 %v89
  %v226 = vunpack.c.l.b16 %v90
  %v227 = vpack.c.b16 %v164, %v163
  %v228 = vpack.c.b16 %v166, %v165
  %v229 = vpack.c.b16 %v168, %v167
  %v230 = vpack.c.b16 %v170, %v169
  %v231 = vpack.c.b16 %v172, %v171
  %v232 = vpack.c.b16 %v174, %v173
  %v233 = vpack.c.b16 %v176, %v175
  %v234 = vpack.c.b16 %v178, %v177
  %v235 = vpack.c.b16 %v180, %v179
  %v236 = vpack.c.b16 %v182, %v181
  %v237 = vpack.c.b16 %v184, %v183
  %v238 = vpack.c.b16 %v186, %v185
  %v239 = vpack.c.b16 %v188, %v187
  %v240 = vpack.c.b16 %v190, %v189
  %v241 = vpack.c.b16 %v192, %v191
  %v242 = vpack.c.b16 %v194, %v193
  %v243 = vpack.c.b16 %v196, %v195
  %v244 = vpack.c.b16 %v198, %v197
  %v245 = vpack.c.b16 %v200, %v199
  %v246 = vpack.c.b16 %v202, %v201
  %v247 = vpack.c.b16 %v204, %v203
  %v248 = vpack.c.b16 %v206, %v205
  %v249 = vpack.c.b16 %v208, %v207
  %v250 = vpack.c.b16 %v210, %v209
  %v251 = vpack.c.b16 %v212, %v211
  %v252 = vpack.c.b16 %v214, %v213
  %v253 = vpack.c.b16 %v216, %v215
  %v254 = vpack.c.b16 %v218, %v217
  %v255 = vpack.c.b16 %v220, %v219
  %v256 = vpack.c.b16 %v222, %v221
  %v257 = vpack.c.b16 %v224, %v223
  %v258 = vpack.c.b16 %v226, %v225
  %vm259 = vcmask 64512
  %v261 = vsel %vm259, %v227, 0
  %v264 = vsel %vm259, %v228, 0
  %v267 = vsel %vm259, %v229, 0
  %v270 = vsel %vm259, %v230, 0
  %v273 = vsel %vm259, %v231, 0
  %v276 = vsel %vm259, %v232, 0
  %v279 = vsel %vm259, %v233, 0
  %v282 = vsel %vm259, %v234, 0
  %v285 = vsel %vm259, %v235, 0
  %v288 = vsel %vm259, %v236, 0
  %v291 = vsel %vm259, %v237, 0
  %v294 = vsel %vm259, %v238, 0
  %v297 = vsel %vm259, %v239, 0
  %v300 = vsel %vm259, %v240, 0
  %v303 = vsel %vm259, %v241, 0
  %v306 = vsel %vm259, %v242, 0
  %v309 = vsel %vm259, %v243, 0
  %v312 = vsel %vm259, %v244, 0
  %v315 = vsel %vm259, %v245, 0
  %v318 = vsel %vm259, %v246, 0
  %v321 = vsel %vm259, %v247, 0
  %v324 = vsel %vm259, %v248, 0
  %v327 = vsel %vm259, %v249, 0
  %v330 = vsel %vm259, %v250, 0
  %v333 = vsel %vm259, %v251, 0
  %v336 = vsel %vm259, %v252, 0
  %v339 = vsel %vm259, %v253, 0
  %v342 = vsel %vm259, %v254, 0
  %v345 = vsel %vm259, %v255, 0
  %v348 = vsel %vm259, %v256, 0
  %v351 = vsel %vm259, %v257, 0
  %v354 = vsel %vm259, %v258, 0
  %vm356 = vcmask 1043456
  %v358 = vsel %vm356, %v91, 0
  %360 = vmatprep.subr.bf16.mxu0 0
  %361 = vmatpush1.bf16.msra.mxu0 0
  %362 = vmatprep.subr.bf16.mxu0 0
  %363 = vmatpush1.bf16.msra.mxu0 0
  %364 = vmatprep.subr.bf16.mxu0 0
  %365 = vmatpush1.bf16.msra.mxu0 0
  %366 = vmatprep.subr.bf16.mxu0 0
  %367 = vmatpush1.bf16.msra.mxu0 0
  %368 = vmatprep.subr.bf16.mxu0 0
  %369 = vmatpush1.bf16.msra.mxu0 0
  %370 = vmatprep.subr.bf16.mxu0 0
  %371 = vmatpush1.bf16.msra.mxu0 0
  %372 = vmatprep.subr.bf16.mxu0 0
  %373 = vmatpush1.bf16.msra.mxu0 0
  %374 = vmatprep.subr.bf16.mxu0 0
  %375 = vmatpush1.bf16.msra.mxu0 %v358
  %376 = vmatprep.subr.bf16.mxu0 0
  %377 = vmatpush2.bf16.msra.mxu0 0
  %378 = vmatprep.subr.bf16.mxu0 0
  %379 = vmatpush2.bf16.msra.mxu0 0
  %380 = vmatprep.subr.bf16.mxu0 0
  %381 = vmatpush2.bf16.msra.mxu0 0
  %382 = vmatprep.subr.bf16.mxu0 0
  %383 = vmatpush2.bf16.msra.mxu0 0
  %384 = vmatprep.subr.bf16.mxu0 0
  %385 = vmatpush2.bf16.msra.mxu0 0
  %386 = vmatprep.subr.bf16.mxu0 0
  %387 = vmatpush2.bf16.msra.mxu0 0
  %388 = vmatprep.subr.bf16.mxu0 0
  %389 = vmatpush2.bf16.msra.mxu0 0
  %390 = vmatprep.subr.bf16.mxu0 0
  %391 = vmatpush2.bf16.msra.mxu0 0
  %392 = vmatprep.mubr.bf16.mxu0 0
  %393 = vmatmul.mubr.bf16.gmra.mxu0 %v261
  %v394 = vpop.f32.mrf.mxu0
  %v395 = vadd.f32 %v97, %v394
  %v396 = vpop.f32.mrf.mxu0
  %v397 = vpop.f32.mrf.mxu0
  %v398 = vadd.f32 %v97, %v397
  %v399 = vpop.f32.mrf.mxu0
  %400 = vmatprep.mubr.bf16.mxu0 0
  %401 = vmatmul.mubr.bf16.gmra.mxu0 %v264
  %v402 = vpop.f32.mrf.mxu0
  %v403 = vadd.f32 %v97, %v402
  %v404 = vpop.f32.mrf.mxu0
  %v405 = vpop.f32.mrf.mxu0
  %v406 = vadd.f32 %v97, %v405
  %v407 = vpop.f32.mrf.mxu0
  %408 = vmatprep.mubr.bf16.mxu0 0
  %409 = vmatmul.mubr.bf16.gmra.mxu0 %v267
  %v410 = vpop.f32.mrf.mxu0
  %v411 = vadd.f32 %v97, %v410
  %v412 = vpop.f32.mrf.mxu0
  %v413 = vpop.f32.mrf.mxu0
  %v414 = vadd.f32 %v97, %v413
  %v415 = vpop.f32.mrf.mxu0
  %416 = vmatprep.mubr.bf16.mxu0 0
  %417 = vmatmul.mubr.bf16.gmra.mxu0 %v270
  %v418 = vpop.f32.mrf.mxu0
  %v419 = vadd.f32 %v97, %v418
  %v420 = vpop.f32.mrf.mxu0
  %v421 = vpop.f32.mrf.mxu0
  %v422 = vadd.f32 %v97, %v421
  %v423 = vpop.f32.mrf.mxu0
  %424 = vmatprep.mubr.bf16.mxu0 0
  %425 = vmatmul.mubr.bf16.gmra.mxu0 %v273
  %v426 = vpop.f32.mrf.mxu0
  %v427 = vadd.f32 %v97, %v426
  %v428 = vpop.f32.mrf.mxu0
  %v429 = vpop.f32.mrf.mxu0
  %v430 = vadd.f32 %v97, %v429
  %v431 = vpop.f32.mrf.mxu0
  %432 = vmatprep.mubr.bf16.mxu0 0
  %433 = vmatmul.mubr.bf16.gmra.mxu0 %v276
  %v434 = vpop.f32.mrf.mxu0
  %v435 = vadd.f32 %v97, %v434
  %v436 = vpop.f32.mrf.mxu0
  %v437 = vpop.f32.mrf.mxu0
  %v438 = vadd.f32 %v97, %v437
  %v439 = vpop.f32.mrf.mxu0
  %440 = vmatprep.mubr.bf16.mxu0 0
  %441 = vmatmul.mubr.bf16.gmra.mxu0 %v279
  %v442 = vpop.f32.mrf.mxu0
  %v443 = vadd.f32 %v97, %v442
  %v444 = vpop.f32.mrf.mxu0
  %v445 = vpop.f32.mrf.mxu0
  %v446 = vadd.f32 %v97, %v445
  %v447 = vpop.f32.mrf.mxu0
  %448 = vmatprep.mubr.bf16.mxu0 0
  %449 = vmatmul.mubr.bf16.gmra.mxu0 %v282
  %v450 = vpop.f32.mrf.mxu0
  %v451 = vadd.f32 %v97, %v450
  %v452 = vpop.f32.mrf.mxu0
  %v453 = vpop.f32.mrf.mxu0
  %v454 = vadd.f32 %v97, %v453
  %v455 = vpop.f32.mrf.mxu0
  %456 = vmatprep.mubr.bf16.mxu0 0
  %457 = vmatmul.mubr.bf16.gmra.mxu0 %v285
  %v458 = vpop.f32.mrf.mxu0
  %v459 = vadd.f32 %v97, %v458
  %v460 = vpop.f32.mrf.mxu0
  %v461 = vpop.f32.mrf.mxu0
  %v462 = vadd.f32 %v97, %v461
  %v463 = vpop.f32.mrf.mxu0
  %464 = vmatprep.mubr.bf16.mxu0 0
  %465 = vmatmul.mubr.bf16.gmra.mxu0 %v288
  %v466 = vpop.f32.mrf.mxu0
  %v467 = vadd.f32 %v97, %v466
  %v468 = vpop.f32.mrf.mxu0
  %v469 = vpop.f32.mrf.mxu0
  %v470 = vadd.f32 %v97, %v469
  %v471 = vpop.f32.mrf.mxu0
  %472 = vmatprep.mubr.bf16.mxu0 0
  %473 = vmatmul.mubr.bf16.gmra.mxu0 %v291
  %v474 = vpop.f32.mrf.mxu0
  %v475 = vadd.f32 %v97, %v474
  %v476 = vpop.f32.mrf.mxu0
  %v477 = vpop.f32.mrf.mxu0
  %v478 = vadd.f32 %v97, %v477
  %v479 = vpop.f32.mrf.mxu0
  %480 = vmatprep.mubr.bf16.mxu0 0
  %481 = vmatmul.mubr.bf16.gmra.mxu0 %v294
  %v482 = vpop.f32.mrf.mxu0
  %v483 = vadd.f32 %v97, %v482
  %v484 = vpop.f32.mrf.mxu0
  %v485 = vpop.f32.mrf.mxu0
  %v486 = vadd.f32 %v97, %v485
  %v487 = vpop.f32.mrf.mxu0
  %488 = vmatprep.mubr.bf16.mxu0 0
  %489 = vmatmul.mubr.bf16.gmra.mxu0 %v297
  %v490 = vpop.f32.mrf.mxu0
  %v491 = vadd.f32 %v97, %v490
  %v492 = vpop.f32.mrf.mxu0
  %v493 = vpop.f32.mrf.mxu0
  %v494 = vadd.f32 %v97, %v493
  %v495 = vpop.f32.mrf.mxu0
  %496 = vmatprep.mubr.bf16.mxu0 0
  %497 = vmatmul.mubr.bf16.gmra.mxu0 %v300
  %v498 = vpop.f32.mrf.mxu0
  %v499 = vadd.f32 %v97, %v498
  %v500 = vpop.f32.mrf.mxu0
  %v501 = vpop.f32.mrf.mxu0
  %v502 = vadd.f32 %v97, %v501
  %v503 = vpop.f32.mrf.mxu0
  %504 = vmatprep.mubr.bf16.mxu0 0
  %505 = vmatmul.mubr.bf16.gmra.mxu0 %v303
  %v506 = vpop.f32.mrf.mxu0
  %v507 = vadd.f32 %v97, %v506
  %v508 = vpop.f32.mrf.mxu0
  %v509 = vpop.f32.mrf.mxu0
  %v510 = vadd.f32 %v97, %v509
  %v511 = vpop.f32.mrf.mxu0
  %512 = vmatprep.mubr.bf16.mxu0 0
  %513 = vmatmul.mubr.bf16.gmra.mxu0 %v306
  %v514 = vpop.f32.mrf.mxu0
  %v515 = vadd.f32 %v97, %v514
  %v516 = vpop.f32.mrf.mxu0
  %v517 = vpop.f32.mrf.mxu0
  %v518 = vadd.f32 %v97, %v517
  %v519 = vpop.f32.mrf.mxu0
  %520 = vmatprep.mubr.bf16.mxu0 0
  %521 = vmatmul.mubr.bf16.gmra.mxu0 %v309
  %v522 = vpop.f32.mrf.mxu0
  %v523 = vadd.f32 %v97, %v522
  %v524 = vpop.f32.mrf.mxu0
  %v525 = vpop.f32.mrf.mxu0
  %v526 = vadd.f32 %v97, %v525
  %v527 = vpop.f32.mrf.mxu0
  %528 = vmatprep.mubr.bf16.mxu0 0
  %529 = vmatmul.mubr.bf16.gmra.mxu0 %v312
  %v530 = vpop.f32.mrf.mxu0
  %v531 = vadd.f32 %v97, %v530
  %v532 = vpop.f32.mrf.mxu0
  %v533 = vpop.f32.mrf.mxu0
  %v534 = vadd.f32 %v97, %v533
  %v535 = vpop.f32.mrf.mxu0
  %536 = vmatprep.mubr.bf16.mxu0 0
  %537 = vmatmul.mubr.bf16.gmra.mxu0 %v315
  %v538 = vpop.f32.mrf.mxu0
  %v539 = vadd.f32 %v97, %v538
  %v540 = vpop.f32.mrf.mxu0
  %v541 = vpop.f32.mrf.mxu0
  %v542 = vadd.f32 %v97, %v541
  %v543 = vpop.f32.mrf.mxu0
  %544 = vmatprep.mubr.bf16.mxu0 0
  %545 = vmatmul.mubr.bf16.gmra.mxu0 %v318
  %v546 = vpop.f32.mrf.mxu0
  %v547 = vadd.f32 %v97, %v546
  %v548 = vpop.f32.mrf.mxu0
  %v549 = vpop.f32.mrf.mxu0
  %v550 = vadd.f32 %v97, %v549
  %v551 = vpop.f32.mrf.mxu0
  %552 = vmatprep.mubr.bf16.mxu0 0
  %553 = vmatmul.mubr.bf16.gmra.mxu0 %v321
  %v554 = vpop.f32.mrf.mxu0
  %v555 = vadd.f32 %v97, %v554
  %v556 = vpop.f32.mrf.mxu0
  %v557 = vpop.f32.mrf.mxu0
  %v558 = vadd.f32 %v97, %v557
  %v559 = vpop.f32.mrf.mxu0
  %560 = vmatprep.mubr.bf16.mxu0 0
  %561 = vmatmul.mubr.bf16.gmra.mxu0 %v324
  %v562 = vpop.f32.mrf.mxu0
  %v563 = vadd.f32 %v97, %v562
  %v564 = vpop.f32.mrf.mxu0
  %v565 = vpop.f32.mrf.mxu0
  %v566 = vadd.f32 %v97, %v565
  %v567 = vpop.f32.mrf.mxu0
  %568 = vmatprep.mubr.bf16.mxu0 0
  %569 = vmatmul.mubr.bf16.gmra.mxu0 %v327
  %v570 = vpop.f32.mrf.mxu0
  %v571 = vadd.f32 %v97, %v570
  %v572 = vpop.f32.mrf.mxu0
  %v573 = vpop.f32.mrf.mxu0
  %v574 = vadd.f32 %v97, %v573
  %v575 = vpop.f32.mrf.mxu0
  %576 = vmatprep.mubr.bf16.mxu0 0
  %577 = vmatmul.mubr.bf16.gmra.mxu0 %v330
  %v578 = vpop.f32.mrf.mxu0
  %v579 = vadd.f32 %v97, %v578
  %v580 = vpop.f32.mrf.mxu0
  %v581 = vpop.f32.mrf.mxu0
  %v582 = vadd.f32 %v97, %v581
  %v583 = vpop.f32.mrf.mxu0
  %584 = vmatprep.mubr.bf16.mxu0 0
  %585 = vmatmul.mubr.bf16.gmra.mxu0 %v333
  %v586 = vpop.f32.mrf.mxu0
  %v587 = vadd.f32 %v97, %v586
  %v588 = vpop.f32.mrf.mxu0
  %v589 = vpop.f32.mrf.mxu0
  %v590 = vadd.f32 %v97, %v589
  %v591 = vpop.f32.mrf.mxu0
  %592 = vmatprep.mubr.bf16.mxu0 0
  %593 = vmatmul.mubr.bf16.gmra.mxu0 %v336
  %v594 = vpop.f32.mrf.mxu0
  %v595 = vadd.f32 %v97, %v594
  %v596 = vpop.f32.mrf.mxu0
  %v597 = vpop.f32.mrf.mxu0
  %v598 = vadd.f32 %v97, %v597
  %v599 = vpop.f32.mrf.mxu0
  %600 = vmatprep.mubr.bf16.mxu0 0
  %601 = vmatmul.mubr.bf16.gmra.mxu0 %v339
  %v602 = vpop.f32.mrf.mxu0
  %v603 = vadd.f32 %v97, %v602
  %v604 = vpop.f32.mrf.mxu0
  %v605 = vpop.f32.mrf.mxu0
  %v606 = vadd.f32 %v97, %v605
  %v607 = vpop.f32.mrf.mxu0
  %608 = vmatprep.mubr.bf16.mxu0 0
  %609 = vmatmul.mubr.bf16.gmra.mxu0 %v342
  %v610 = vpop.f32.mrf.mxu0
  %v611 = vadd.f32 %v97, %v610
  %v612 = vpop.f32.mrf.mxu0
  %v613 = vpop.f32.mrf.mxu0
  %v614 = vadd.f32 %v97, %v613
  %v615 = vpop.f32.mrf.mxu0
  %616 = vmatprep.mubr.bf16.mxu0 0
  %617 = vmatmul.mubr.bf16.gmra.mxu0 %v345
  %v618 = vpop.f32.mrf.mxu0
  %v619 = vadd.f32 %v97, %v618
  %v620 = vpop.f32.mrf.mxu0
  %v621 = vpop.f32.mrf.mxu0
  %v622 = vadd.f32 %v97, %v621
  %v623 = vpop.f32.mrf.mxu0
  %624 = vmatprep.mubr.bf16.mxu0 0
  %625 = vmatmul.mubr.bf16.gmra.mxu0 %v348
  %v626 = vpop.f32.mrf.mxu0
  %v627 = vadd.f32 %v97, %v626
  %v628 = vpop.f32.mrf.mxu0
  %v629 = vpop.f32.mrf.mxu0
  %v630 = vadd.f32 %v97, %v629
  %v631 = vpop.f32.mrf.mxu0
  %632 = vmatprep.mubr.bf16.mxu0 0
  %633 = vmatmul.mubr.bf16.gmra.mxu0 %v351
  %v634 = vpop.f32.mrf.mxu0
  %v635 = vadd.f32 %v97, %v634
  %v636 = vpop.f32.mrf.mxu0
  %v637 = vpop.f32.mrf.mxu0
  %v638 = vadd.f32 %v97, %v637
  %v639 = vpop.f32.mrf.mxu0
  %640 = vmatprep.mubr.bf16.mxu0 0
  %641 = vmatmul.mubr.bf16.gmra.mxu0 %v354
  %v642 = vpop.f32.mrf.mxu0
  %v643 = vadd.f32 %v97, %v642
  %v644 = vpop.f32.mrf.mxu0
  %v645 = vpop.f32.mrf.mxu0
  %v646 = vadd.f32 %v97, %v645
  %v647 = vpop.f32.mrf.mxu0
  %648 = vdwg.mxu0
  %v649 = vmul.f32 %v395, 0.2
  %v650 = vmul.f32 %v398, 0.2
  %v651 = vmul.f32 %v403, 0.2
  %v652 = vmul.f32 %v406, 0.2
  %v653 = vmul.f32 %v411, 0.2
  %v654 = vmul.f32 %v414, 0.2
  %v655 = vmul.f32 %v419, 0.2
  %v656 = vmul.f32 %v422, 0.2
  %v657 = vmul.f32 %v427, 0.2
  %v658 = vmul.f32 %v430, 0.2
  %v659 = vmul.f32 %v435, 0.2
  %v660 = vmul.f32 %v438, 0.2
  %v661 = vmul.f32 %v443, 0.2
  %v662 = vmul.f32 %v446, 0.2
  %v663 = vmul.f32 %v451, 0.2
  %v664 = vmul.f32 %v454, 0.2
  %v665 = vmul.f32 %v459, 0.2
  %v666 = vmul.f32 %v462, 0.2
  %v667 = vmul.f32 %v467, 0.2
  %v668 = vmul.f32 %v470, 0.2
  %v669 = vmul.f32 %v475, 0.2
  %v670 = vmul.f32 %v478, 0.2
  %v671 = vmul.f32 %v483, 0.2
  %v672 = vmul.f32 %v486, 0.2
  %v673 = vmul.f32 %v491, 0.2
  %v674 = vmul.f32 %v494, 0.2
  %v675 = vmul.f32 %v499, 0.2
  %v676 = vmul.f32 %v502, 0.2
  %v677 = vmul.f32 %v507, 0.2
  %v678 = vmul.f32 %v510, 0.2
  %v679 = vmul.f32 %v515, 0.2
  %v680 = vmul.f32 %v518, 0.2
  %v681 = vmul.f32 %v523, 0.2
  %v682 = vmul.f32 %v526, 0.2
  %v683 = vmul.f32 %v531, 0.2
  %v684 = vmul.f32 %v534, 0.2
  %v685 = vmul.f32 %v539, 0.2
  %v686 = vmul.f32 %v542, 0.2
  %v687 = vmul.f32 %v547, 0.2
  %v688 = vmul.f32 %v550, 0.2
  %v689 = vmul.f32 %v555, 0.2
  %v690 = vmul.f32 %v558, 0.2
  %v691 = vmul.f32 %v563, 0.2
  %v692 = vmul.f32 %v566, 0.2
  %v693 = vmul.f32 %v571, 0.2
  %v694 = vmul.f32 %v574, 0.2
  %v695 = vmul.f32 %v579, 0.2
  %v696 = vmul.f32 %v582, 0.2
  %v697 = vmul.f32 %v587, 0.2
  %v698 = vmul.f32 %v590, 0.2
  %v699 = vmul.f32 %v595, 0.2
  %v700 = vmul.f32 %v598, 0.2
  %v701 = vmul.f32 %v603, 0.2
  %v702 = vmul.f32 %v606, 0.2
  %v703 = vmul.f32 %v611, 0.2
  %v704 = vmul.f32 %v614, 0.2
  %v705 = vmul.f32 %v619, 0.2
  %v706 = vmul.f32 %v622, 0.2
  %v707 = vmul.f32 %v627, 0.2
  %v708 = vmul.f32 %v630, 0.2
  %v709 = vmul.f32 %v635, 0.2
  %v710 = vmul.f32 %v638, 0.2
  %v711 = vmul.f32 %v643, 0.2
  %v712 = vmul.f32 %v646, 0.2
  %v713 = vmax.f32 %v395, %v649
  %v714 = vmax.f32 %v398, %v650
  %v715 = vmax.f32 %v403, %v651
  %v716 = vmax.f32 %v406, %v652
  %v717 = vmax.f32 %v411, %v653
  %v718 = vmax.f32 %v414, %v654
  %v719 = vmax.f32 %v419, %v655
  %v720 = vmax.f32 %v422, %v656
  %v721 = vmax.f32 %v427, %v657
  %v722 = vmax.f32 %v430, %v658
  %v723 = vmax.f32 %v435, %v659
  %v724 = vmax.f32 %v438, %v660
  %v725 = vmax.f32 %v443, %v661
  %v726 = vmax.f32 %v446, %v662
  %v727 = vmax.f32 %v451, %v663
  %v728 = vmax.f32 %v454, %v664
  %v729 = vmax.f32 %v459, %v665
  %v730 = vmax.f32 %v462, %v666
  %v731 = vmax.f32 %v467, %v667
  %v732 = vmax.f32 %v470, %v668
  %v733 = vmax.f32 %v475, %v669
  %v734 = vmax.f32 %v478, %v670
  %v735 = vmax.f32 %v483, %v671
  %v736 = vmax.f32 %v486, %v672
  %v737 = vmax.f32 %v491, %v673
  %v738 = vmax.f32 %v494, %v674
  %v739 = vmax.f32 %v499, %v675
  %v740 = vmax.f32 %v502, %v676
  %v741 = vmax.f32 %v507, %v677
  %v742 = vmax.f32 %v510, %v678
  %v743 = vmax.f32 %v515, %v679
  %v744 = vmax.f32 %v518, %v680
  %v745 = vmax.f32 %v523, %v681
  %v746 = vmax.f32 %v526, %v682
  %v747 = vmax.f32 %v531, %v683
  %v748 = vmax.f32 %v534, %v684
  %v749 = vmax.f32 %v539, %v685
  %v750 = vmax.f32 %v542, %v686
  %v751 = vmax.f32 %v547, %v687
  %v752 = vmax.f32 %v550, %v688
  %v753 = vmax.f32 %v555, %v689
  %v754 = vmax.f32 %v558, %v690
  %v755 = vmax.f32 %v563, %v691
  %v756 = vmax.f32 %v566, %v692
  %v757 = vmax.f32 %v571, %v693
  %v758 = vmax.f32 %v574, %v694
  %v759 = vmax.f32 %v579, %v695
  %v760 = vmax.f32 %v582, %v696
  %v761 = vmax.f32 %v587, %v697
  %v762 = vmax.f32 %v590, %v698
  %v763 = vmax.f32 %v595, %v699
  %v764 = vmax.f32 %v598, %v700
  %v765 = vmax.f32 %v603, %v701
  %v766 = vmax.f32 %v606, %v702
  %v767 = vmax.f32 %v611, %v703
  %v768 = vmax.f32 %v614, %v704
  %v769 = vmax.f32 %v619, %v705
  %v770 = vmax.f32 %v622, %v706
  %v771 = vmax.f32 %v627, %v707
  %v772 = vmax.f32 %v630, %v708
  %v773 = vmax.f32 %v635, %v709
  %v774 = vmax.f32 %v638, %v710
  %v775 = vmax.f32 %v643, %v711
  %v776 = vmax.f32 %v646, %v712
  %v777 = vpack.c.bf16 %v714, %v713
  %v778 = vpack.c.bf16 %v716, %v715
  %v779 = vpack.c.bf16 %v718, %v717
  %v780 = vpack.c.bf16 %v720, %v719
  %v781 = vpack.c.bf16 %v722, %v721
  %v782 = vpack.c.bf16 %v724, %v723
  %v783 = vpack.c.bf16 %v726, %v725
  %v784 = vpack.c.bf16 %v728, %v727
  %v785 = vpack.c.bf16 %v730, %v729
  %v786 = vpack.c.bf16 %v732, %v731
  %v787 = vpack.c.bf16 %v734, %v733
  %v788 = vpack.c.bf16 %v736, %v735
  %v789 = vpack.c.bf16 %v738, %v737
  %v790 = vpack.c.bf16 %v740, %v739
  %v791 = vpack.c.bf16 %v742, %v741
  %v792 = vpack.c.bf16 %v744, %v743
  %v793 = vpack.c.bf16 %v746, %v745
  %v794 = vpack.c.bf16 %v748, %v747
  %v795 = vpack.c.bf16 %v750, %v749
  %v796 = vpack.c.bf16 %v752, %v751
  %v797 = vpack.c.bf16 %v754, %v753
  %v798 = vpack.c.bf16 %v756, %v755
  %v799 = vpack.c.bf16 %v758, %v757
  %v800 = vpack.c.bf16 %v760, %v759
  %v801 = vpack.c.bf16 %v762, %v761
  %v802 = vpack.c.bf16 %v764, %v763
  %v803 = vpack.c.bf16 %v766, %v765
  %v804 = vpack.c.bf16 %v768, %v767
  %v805 = vpack.c.bf16 %v770, %v769
  %v806 = vpack.c.bf16 %v772, %v771
  %v807 = vpack.c.bf16 %v774, %v773
  %v808 = vpack.c.bf16 %v776, %v775
  %v809 = vld [vmem:[%s3] sm:$0xf]
  %v810 = vld [vmem:[%s3 + $0x4] sm:$0xf]
  %v811 = vld [vmem:[%s3 + $0x8] sm:$0xf]
  %v812 = vld [vmem:[%s3 + $0xc] sm:$0xf]
  %v813 = vld [vmem:[%s3 + $0x10] sm:$0xf]
  %v814 = vld [vmem:[%s3 + $0x14] sm:$0xf]
  %v815 = vld [vmem:[%s3 + $0x18] sm:$0xf]
  %v816 = vld [vmem:[%s3 + $0x1c] sm:$0xf]
  %v825 = vunpack.c.l.b16 %v809
  %v826 = vunpack.c.l.b16 %v810
  %v827 = vunpack.c.l.b16 %v811
  %v828 = vunpack.c.l.b16 %v812
  %v829 = vunpack.c.l.b16 %v813
  %v830 = vunpack.c.l.b16 %v814
  %v831 = vunpack.c.l.b16 %v815
  %v832 = vunpack.c.l.b16 %v816
  %v833 = vpack.c.b16 %v826, %v825
  %v834 = vpack.c.b16 %v828, %v827
  %v835 = vpack.c.b16 %v830, %v829
  %v836 = vpack.c.b16 %v832, %v831
  %vm841 = vcmask 523264
  %v843 = vsel %vm841, %v777, 0
  %v846 = vsel %vm841, %v778, 0
  %v849 = vsel %vm841, %v779, 0
  %v852 = vsel %vm841, %v780, 0
  %v855 = vsel %vm841, %v781, 0
  %v858 = vsel %vm841, %v782, 0
  %v861 = vsel %vm841, %v783, 0
  %v864 = vsel %vm841, %v784, 0
  %v867 = vsel %vm841, %v785, 0
  %v870 = vsel %vm841, %v786, 0
  %v873 = vsel %vm841, %v787, 0
  %v876 = vsel %vm841, %v788, 0
  %v879 = vsel %vm841, %v789, 0
  %v882 = vsel %vm841, %v790, 0
  %v885 = vsel %vm841, %v791, 0
  %v888 = vsel %vm841, %v792, 0
  %v891 = vsel %vm841, %v793, 0
  %v894 = vsel %vm841, %v794, 0
  %v897 = vsel %vm841, %v795, 0
  %v900 = vsel %vm841, %v796, 0
  %v903 = vsel %vm841, %v797, 0
  %v906 = vsel %vm841, %v798, 0
  %v909 = vsel %vm841, %v799, 0
  %v912 = vsel %vm841, %v800, 0
  %v915 = vsel %vm841, %v801, 0
  %v918 = vsel %vm841, %v802, 0
  %v921 = vsel %vm841, %v803, 0
  %v924 = vsel %vm841, %v804, 0
  %v927 = vsel %vm841, %v805, 0
  %v930 = vsel %vm841, %v806, 0
  %v933 = vsel %vm841, %v807, 0
  %v936 = vsel %vm841, %v808, 0
  %938 = vmatprep.subr.bf16.mxu0 0
  %939 = vmatpush1.bf16.msra.mxu0 0
  %940 = vmatprep.subr.bf16.mxu0 0
  %941 = vmatpush1.bf16.msra.mxu0 0
  %942 = vmatprep.subr.bf16.mxu0 0
  %943 = vmatpush1.bf16.msra.mxu0 0
  %944 = vmatprep.subr.bf16.mxu0 0
  %945 = vmatpush1.bf16.msra.mxu0 0
  %946 = vmatprep.subr.bf16.mxu0 0
  %947 = vmatpush1.bf16.msra.mxu0 %v836
  %948 = vmatprep.subr.bf16.mxu0 0
  %949 = vmatpush1.bf16.msra.mxu0 %v835
  %950 = vmatprep.subr.bf16.mxu0 0
  %951 = vmatpush1.bf16.msra.mxu0 %v834
  %952 = vmatprep.subr.bf16.mxu0 0
  %953 = vmatpush1.bf16.msra.mxu0 %v833
  %954 = vmatprep.subr.bf16.mxu0 0
  %955 = vmatpush2.bf16.msra.mxu0 0
  %956 = vmatprep.subr.bf16.mxu0 0
  %957 = vmatpush2.bf16.msra.mxu0 0
  %958 = vmatprep.subr.bf16.mxu0 0
  %959 = vmatpush2.bf16.msra.mxu0 0
  %960 = vmatprep.subr.bf16.mxu0 0
  %961 = vmatpush2.bf16.msra.mxu0 0
  %962 = vmatprep.subr.bf16.mxu0 0
  %963 = vmatpush2.bf16.msra.mxu0 0
  %964 = vmatprep.subr.bf16.mxu0 0
  %965 = vmatpush2.bf16.msra.mxu0 0
  %966 = vmatprep.subr.bf16.mxu0 0
  %967 = vmatpush2.bf16.msra.mxu0 0
  %968 = vmatprep.subr.bf16.mxu0 0
  %969 = vmatpush2.bf16.msra.mxu0 0
  %970 = vmatprep.mubr.bf16.mxu0 0
  %971 = vmatmul.mubr.bf16.gmra.mxu0 %v843
  %v972 = vpop.f32.mrf.mxu0
  %v973 = vadd.f32 0.0, %v972
  %v974 = vpop.f32.mrf.mxu0
  %v975 = vpop.f32.mrf.mxu0
  %v976 = vadd.f32 0.0, %v975
  %v977 = vpop.f32.mrf.mxu0
  %978 = vmatprep.mubr.bf16.mxu0 0
  %979 = vmatmul.mubr.bf16.gmra.mxu0 %v846
  %v980 = vpop.f32.mrf.mxu0
  %v981 = vadd.f32 0.0, %v980
  %v982 = vpop.f32.mrf.mxu0
  %v983 = vpop.f32.mrf.mxu0
  %v984 = vadd.f32 0.0, %v983
  %v985 = vpop.f32.mrf.mxu0
  %986 = vmatprep.mubr.bf16.mxu0 0
  %987 = vmatmul.mubr.bf16.gmra.mxu0 %v849
  %v988 = vpop.f32.mrf.mxu0
  %v989 = vadd.f32 0.0, %v988
  %v990 = vpop.f32.mrf.mxu0
  %v991 = vpop.f32.mrf.mxu0
  %v992 = vadd.f32 0.0, %v991
  %v993 = vpop.f32.mrf.mxu0
  %994 = vmatprep.mubr.bf16.mxu0 0
  %995 = vmatmul.mubr.bf16.gmra.mxu0 %v852
  %v996 = vpop.f32.mrf.mxu0
  %v997 = vadd.f32 0.0, %v996
  %v998 = vpop.f32.mrf.mxu0
  %v999 = vpop.f32.mrf.mxu0
  %v1000 = vadd.f32 0.0, %v999
  %v1001 = vpop.f32.mrf.mxu0
  %1002 = vmatprep.mubr.bf16.mxu0 0
  %1003 = vmatmul.mubr.bf16.gmra.mxu0 %v855
  %v1004 = vpop.f32.mrf.mxu0
  %v1005 = vadd.f32 0.0, %v1004
  %v1006 = vpop.f32.mrf.mxu0
  %v1007 = vpop.f32.mrf.mxu0
  %v1008 = vadd.f32 0.0, %v1007
  %v1009 = vpop.f32.mrf.mxu0
  %1010 = vmatprep.mubr.bf16.mxu0 0
  %1011 = vmatmul.mubr.bf16.gmra.mxu0 %v858
  %v1012 = vpop.f32.mrf.mxu0
  %v1013 = vadd.f32 0.0, %v1012
  %v1014 = vpop.f32.mrf.mxu0
  %v1015 = vpop.f32.mrf.mxu0
  %v1016 = vadd.f32 0.0, %v1015
  %v1017 = vpop.f32.mrf.mxu0
  %1018 = vmatprep.mubr.bf16.mxu0 0
  %1019 = vmatmul.mubr.bf16.gmra.mxu0 %v861
  %v1020 = vpop.f32.mrf.mxu0
  %v1021 = vadd.f32 0.0, %v1020
  %v1022 = vpop.f32.mrf.mxu0
  %v1023 = vpop.f32.mrf.mxu0
  %v1024 = vadd.f32 0.0, %v1023
  %v1025 = vpop.f32.mrf.mxu0
  %1026 = vmatprep.mubr.bf16.mxu0 0
  %1027 = vmatmul.mubr.bf16.gmra.mxu0 %v864
  %v1028 = vpop.f32.mrf.mxu0
  %v1029 = vadd.f32 0.0, %v1028
  %v1030 = vpop.f32.mrf.mxu0
  %v1031 = vpop.f32.mrf.mxu0
  %v1032 = vadd.f32 0.0, %v1031
  %v1033 = vpop.f32.mrf.mxu0
  %1034 = vmatprep.mubr.bf16.mxu0 0
  %1035 = vmatmul.mubr.bf16.gmra.mxu0 %v867
  %v1036 = vpop.f32.mrf.mxu0
  %v1037 = vadd.f32 0.0, %v1036
  %v1038 = vpop.f32.mrf.mxu0
  %v1039 = vpop.f32.mrf.mxu0
  %v1040 = vadd.f32 0.0, %v1039
  %v1041 = vpop.f32.mrf.mxu0
  %1042 = vmatprep.mubr.bf16.mxu0 0
  %1043 = vmatmul.mubr.bf16.gmra.mxu0 %v870
  %v1044 = vpop.f32.mrf.mxu0
  %v1045 = vadd.f32 0.0, %v1044
  %v1046 = vpop.f32.mrf.mxu0
  %v1047 = vpop.f32.mrf.mxu0
  %v1048 = vadd.f32 0.0, %v1047
  %v1049 = vpop.f32.mrf.mxu0
  %1050 = vmatprep.mubr.bf16.mxu0 0
  %1051 = vmatmul.mubr.bf16.gmra.mxu0 %v873
  %v1052 = vpop.f32.mrf.mxu0
  %v1053 = vadd.f32 0.0, %v1052
  %v1054 = vpop.f32.mrf.mxu0
  %v1055 = vpop.f32.mrf.mxu0
  %v1056 = vadd.f32 0.0, %v1055
  %v1057 = vpop.f32.mrf.mxu0
  %1058 = vmatprep.mubr.bf16.mxu0 0
  %1059 = vmatmul.mubr.bf16.gmra.mxu0 %v876
  %v1060 = vpop.f32.mrf.mxu0
  %v1061 = vadd.f32 0.0, %v1060
  %v1062 = vpop.f32.mrf.mxu0
  %v1063 = vpop.f32.mrf.mxu0
  %v1064 = vadd.f32 0.0, %v1063
  %v1065 = vpop.f32.mrf.mxu0
  %1066 = vmatprep.mubr.bf16.mxu0 0
  %1067 = vmatmul.mubr.bf16.gmra.mxu0 %v879
  %v1068 = vpop.f32.mrf.mxu0
  %v1069 = vadd.f32 0.0, %v1068
  %v1070 = vpop.f32.mrf.mxu0
  %v1071 = vpop.f32.mrf.mxu0
  %v1072 = vadd.f32 0.0, %v1071
  %v1073 = vpop.f32.mrf.mxu0
  %1074 = vmatprep.mubr.bf16.mxu0 0
  %1075 = vmatmul.mubr.bf16.gmra.mxu0 %v882
  %v1076 = vpop.f32.mrf.mxu0
  %v1077 = vadd.f32 0.0, %v1076
  %v1078 = vpop.f32.mrf.mxu0
  %v1079 = vpop.f32.mrf.mxu0
  %v1080 = vadd.f32 0.0, %v1079
  %v1081 = vpop.f32.mrf.mxu0
  %1082 = vmatprep.mubr.bf16.mxu0 0
  %1083 = vmatmul.mubr.bf16.gmra.mxu0 %v885
  %v1084 = vpop.f32.mrf.mxu0
  %v1085 = vadd.f32 0.0, %v1084
  %v1086 = vpop.f32.mrf.mxu0
  %v1087 = vpop.f32.mrf.mxu0
  %v1088 = vadd.f32 0.0, %v1087
  %v1089 = vpop.f32.mrf.mxu0
  %1090 = vmatprep.mubr.bf16.mxu0 0
  %1091 = vmatmul.mubr.bf16.gmra.mxu0 %v888
  %v1092 = vpop.f32.mrf.mxu0
  %v1093 = vadd.f32 0.0, %v1092
  %v1094 = vpop.f32.mrf.mxu0
  %v1095 = vpop.f32.mrf.mxu0
  %v1096 = vadd.f32 0.0, %v1095
  %v1097 = vpop.f32.mrf.mxu0
  %1098 = vmatprep.mubr.bf16.mxu0 0
  %1099 = vmatmul.mubr.bf16.gmra.mxu0 %v891
  %v1100 = vpop.f32.mrf.mxu0
  %v1101 = vadd.f32 0.0, %v1100
  %v1102 = vpop.f32.mrf.mxu0
  %v1103 = vpop.f32.mrf.mxu0
  %v1104 = vadd.f32 0.0, %v1103
  %v1105 = vpop.f32.mrf.mxu0
  %1106 = vmatprep.mubr.bf16.mxu0 0
  %1107 = vmatmul.mubr.bf16.gmra.mxu0 %v894
  %v1108 = vpop.f32.mrf.mxu0
  %v1109 = vadd.f32 0.0, %v1108
  %v1110 = vpop.f32.mrf.mxu0
  %v1111 = vpop.f32.mrf.mxu0
  %v1112 = vadd.f32 0.0, %v1111
  %v1113 = vpop.f32.mrf.mxu0
  %1114 = vmatprep.mubr.bf16.mxu0 0
  %1115 = vmatmul.mubr.bf16.gmra.mxu0 %v897
  %v1116 = vpop.f32.mrf.mxu0
  %v1117 = vadd.f32 0.0, %v1116
  %v1118 = vpop.f32.mrf.mxu0
  %v1119 = vpop.f32.mrf.mxu0
  %v1120 = vadd.f32 0.0, %v1119
  %v1121 = vpop.f32.mrf.mxu0
  %1122 = vmatprep.mubr.bf16.mxu0 0
  %1123 = vmatmul.mubr.bf16.gmra.mxu0 %v900
  %v1124 = vpop.f32.mrf.mxu0
  %v1125 = vadd.f32 0.0, %v1124
  %v1126 = vpop.f32.mrf.mxu0
  %v1127 = vpop.f32.mrf.mxu0
  %v1128 = vadd.f32 0.0, %v1127
  %v1129 = vpop.f32.mrf.mxu0
  %1130 = vmatprep.mubr.bf16.mxu0 0
  %1131 = vmatmul.mubr.bf16.gmra.mxu0 %v903
  %v1132 = vpop.f32.mrf.mxu0
  %v1133 = vadd.f32 0.0, %v1132
  %v1134 = vpop.f32.mrf.mxu0
  %v1135 = vpop.f32.mrf.mxu0
  %v1136 = vadd.f32 0.0, %v1135
  %v1137 = vpop.f32.mrf.mxu0
  %1138 = vmatprep.mubr.bf16.mxu0 0
  %1139 = vmatmul.mubr.bf16.gmra.mxu0 %v906
  %v1140 = vpop.f32.mrf.mxu0
  %v1141 = vadd.f32 0.0, %v1140
  %v1142 = vpop.f32.mrf.mxu0
  %v1143 = vpop.f32.mrf.mxu0
  %v1144 = vadd.f32 0.0, %v1143
  %v1145 = vpop.f32.mrf.mxu0
  %1146 = vmatprep.mubr.bf16.mxu0 0
  %1147 = vmatmul.mubr.bf16.gmra.mxu0 %v909
  %v1148 = vpop.f32.mrf.mxu0
  %v1149 = vadd.f32 0.0, %v1148
  %v1150 = vpop.f32.mrf.mxu0
  %v1151 = vpop.f32.mrf.mxu0
  %v1152 = vadd.f32 0.0, %v1151
  %v1153 = vpop.f32.mrf.mxu0
  %1154 = vmatprep.mubr.bf16.mxu0 0
  %1155 = vmatmul.mubr.bf16.gmra.mxu0 %v912
  %v1156 = vpop.f32.mrf.mxu0
  %v1157 = vadd.f32 0.0, %v1156
  %v1158 = vpop.f32.mrf.mxu0
  %v1159 = vpop.f32.mrf.mxu0
  %v1160 = vadd.f32 0.0, %v1159
  %v1161 = vpop.f32.mrf.mxu0
  %1162 = vmatprep.mubr.bf16.mxu0 0
  %1163 = vmatmul.mubr.bf16.gmra.mxu0 %v915
  %v1164 = vpop.f32.mrf.mxu0
  %v1165 = vadd.f32 0.0, %v1164
  %v1166 = vpop.f32.mrf.mxu0
  %v1167 = vpop.f32.mrf.mxu0
  %v1168 = vadd.f32 0.0, %v1167
  %v1169 = vpop.f32.mrf.mxu0
  %1170 = vmatprep.mubr.bf16.mxu0 0
  %1171 = vmatmul.mubr.bf16.gmra.mxu0 %v918
  %v1172 = vpop.f32.mrf.mxu0
  %v1173 = vadd.f32 0.0, %v1172
  %v1174 = vpop.f32.mrf.mxu0
  %v1175 = vpop.f32.mrf.mxu0
  %v1176 = vadd.f32 0.0, %v1175
  %v1177 = vpop.f32.mrf.mxu0
  %1178 = vmatprep.mubr.bf16.mxu0 0
  %1179 = vmatmul.mubr.bf16.gmra.mxu0 %v921
  %v1180 = vpop.f32.mrf.mxu0
  %v1181 = vadd.f32 0.0, %v1180
  %v1182 = vpop.f32.mrf.mxu0
  %v1183 = vpop.f32.mrf.mxu0
  %v1184 = vadd.f32 0.0, %v1183
  %v1185 = vpop.f32.mrf.mxu0
  %1186 = vmatprep.mubr.bf16.mxu0 0
  %1187 = vmatmul.mubr.bf16.gmra.mxu0 %v924
  %v1188 = vpop.f32.mrf.mxu0
  %v1189 = vadd.f32 0.0, %v1188
  %v1190 = vpop.f32.mrf.mxu0
  %v1191 = vpop.f32.mrf.mxu0
  %v1192 = vadd.f32 0.0, %v1191
  %v1193 = vpop.f32.mrf.mxu0
  %1194 = vmatprep.mubr.bf16.mxu0 0
  %1195 = vmatmul.mubr.bf16.gmra.mxu0 %v927
  %v1196 = vpop.f32.mrf.mxu0
  %v1197 = vadd.f32 0.0, %v1196
  %v1198 = vpop.f32.mrf.mxu0
  %v1199 = vpop.f32.mrf.mxu0
  %v1200 = vadd.f32 0.0, %v1199
  %v1201 = vpop.f32.mrf.mxu0
  %1202 = vmatprep.mubr.bf16.mxu0 0
  %1203 = vmatmul.mubr.bf16.gmra.mxu0 %v930
  %v1204 = vpop.f32.mrf.mxu0
  %v1205 = vadd.f32 0.0, %v1204
  %v1206 = vpop.f32.mrf.mxu0
  %v1207 = vpop.f32.mrf.mxu0
  %v1208 = vadd.f32 0.0, %v1207
  %v1209 = vpop.f32.mrf.mxu0
  %1210 = vmatprep.mubr.bf16.mxu0 0
  %1211 = vmatmul.mubr.bf16.gmra.mxu0 %v933
  %v1212 = vpop.f32.mrf.mxu0
  %v1213 = vadd.f32 0.0, %v1212
  %v1214 = vpop.f32.mrf.mxu0
  %v1215 = vpop.f32.mrf.mxu0
  %v1216 = vadd.f32 0.0, %v1215
  %v1217 = vpop.f32.mrf.mxu0
  %1218 = vmatprep.mubr.bf16.mxu0 0
  %1219 = vmatmul.mubr.bf16.gmra.mxu0 %v936
  %v1220 = vpop.f32.mrf.mxu0
  %v1221 = vadd.f32 0.0, %v1220
  %v1222 = vpop.f32.mrf.mxu0
  %v1223 = vpop.f32.mrf.mxu0
  %v1224 = vadd.f32 0.0, %v1223
  %v1225 = vpop.f32.mrf.mxu0
  %1226 = vdwg.mxu0
  %1227 = vst [vmem:[%s4] sm:$0xff] %v973
  %1228 = vst [vmem:[%s4 + $0x8] sm:$0xff] %v976
  %1229 = vst [vmem:[%s4 + $0x10] sm:$0xff] %v981
  %1230 = vst [vmem:[%s4 + $0x18] sm:$0xff] %v984
  %1231 = vst [vmem:[%s4 + $0x20] sm:$0xff] %v989
  %1232 = vst [vmem:[%s4 + $0x28] sm:$0xff] %v992
  %1233 = vst [vmem:[%s4 + $0x30] sm:$0xff] %v997
  %1234 = vst [vmem:[%s4 + $0x38] sm:$0xff] %v1000
  %1235 = vst [vmem:[%s4 + $0x40] sm:$0xff] %v1005
  %1236 = vst [vmem:[%s4 + $0x48] sm:$0xff] %v1008
  %1237 = vst [vmem:[%s4 + $0x50] sm:$0xff] %v1013
  %1238 = vst [vmem:[%s4 + $0x58] sm:$0xff] %v1016
  %1239 = vst [vmem:[%s4 + $0x60] sm:$0xff] %v1021
  %1240 = vst [vmem:[%s4 + $0x68] sm:$0xff] %v1024
  %1241 = vst [vmem:[%s4 + $0x70] sm:$0xff] %v1029
  %1242 = vst [vmem:[%s4 + $0x78] sm:$0xff] %v1032
  %1243 = vst [vmem:[%s4 + $0x80] sm:$0xff] %v1037
  %1244 = vst [vmem:[%s4 + $0x88] sm:$0xff] %v1040
  %1245 = vst [vmem:[%s4 + $0x90] sm:$0xff] %v1045
  %1246 = vst [vmem:[%s4 + $0x98] sm:$0xff] %v1048
  %1247 = vst [vmem:[%s4 + $0xa0] sm:$0xff] %v1053
  %1248 = vst [vmem:[%s4 + $0xa8] sm:$0xff] %v1056
  %1249 = vst [vmem:[%s4 + $0xb0] sm:$0xff] %v1061
  %1250 = vst [vmem:[%s4 + $0xb8] sm:$0xff] %v1064
  %1251 = vst [vmem:[%s4 + $0xc0] sm:$0xff] %v1069
  %1252 = vst [vmem:[%s4 + $0xc8] sm:$0xff] %v1072
  %1253 = vst [vmem:[%s4 + $0xd0] sm:$0xff] %v1077
  %1254 = vst [vmem:[%s4 + $0xd8] sm:$0xff] %v1080
  %1255 = vst [vmem:[%s4 + $0xe0] sm:$0xff] %v1085
  %1256 = vst [vmem:[%s4 + $0xe8] sm:$0xff] %v1088
  %1257 = vst [vmem:[%s4 + $0xf0] sm:$0xff] %v1093
  %1258 = vst [vmem:[%s4 + $0xf8] sm:$0xff] %v1096
  %1259 = vst [vmem:[%s4 + $0x100] sm:$0xff] %v1101
  %1260 = vst [vmem:[%s4 + $0x108] sm:$0xff] %v1104
  %1261 = vst [vmem:[%s4 + $0x110] sm:$0xff] %v1109
  %1262 = vst [vmem:[%s4 + $0x118] sm:$0xff] %v1112
  %1263 = vst [vmem:[%s4 + $0x120] sm:$0xff] %v1117
  %1264 = vst [vmem:[%s4 + $0x128] sm:$0xff] %v1120
  %1265 = vst [vmem:[%s4 + $0x130] sm:$0xff] %v1125
  %1266 = vst [vmem:[%s4 + $0x138] sm:$0xff] %v1128
  %1267 = vst [vmem:[%s4 + $0x140] sm:$0xff] %v1133
  %1268 = vst [vmem:[%s4 + $0x148] sm:$0xff] %v1136
  %1269 = vst [vmem:[%s4 + $0x150] sm:$0xff] %v1141
  %1270 = vst [vmem:[%s4 + $0x158] sm:$0xff] %v1144
  %1271 = vst [vmem:[%s4 + $0x160] sm:$0xff] %v1149
  %1272 = vst [vmem:[%s4 + $0x168] sm:$0xff] %v1152
  %1273 = vst [vmem:[%s4 + $0x170] sm:$0xff] %v1157
  %1274 = vst [vmem:[%s4 + $0x178] sm:$0xff] %v1160
  %1275 = vst [vmem:[%s4 + $0x180] sm:$0xff] %v1165
  %1276 = vst [vmem:[%s4 + $0x188] sm:$0xff] %v1168
  %1277 = vst [vmem:[%s4 + $0x190] sm:$0xff] %v1173
  %1278 = vst [vmem:[%s4 + $0x198] sm:$0xff] %v1176
  %1279 = vst [vmem:[%s4 + $0x1a0] sm:$0xff] %v1181
  %1280 = vst [vmem:[%s4 + $0x1a8] sm:$0xff] %v1184
  %1281 = vst [vmem:[%s4 + $0x1b0] sm:$0xff] %v1189
  %1282 = vst [vmem:[%s4 + $0x1b8] sm:$0xff] %v1192
  %1283 = vst [vmem:[%s4 + $0x1c0] sm:$0xff] %v1197
  %1284 = vst [vmem:[%s4 + $0x1c8] sm:$0xff] %v1200
  %1285 = vst [vmem:[%s4 + $0x1d0] sm:$0xff] %v1205
  %1286 = vst [vmem:[%s4 + $0x1d8] sm:$0xff] %v1208
  %1287 = vst [vmem:[%s4 + $0x1e0] sm:$0xff] %v1213
  %1288 = vst [vmem:[%s4 + $0x1e8] sm:$0xff] %v1216
  %1289 = vst [vmem:[%s4 + $0x1f0] sm:$0xff] %v1221
  %1290 = vst [vmem:[%s4 + $0x1f8] sm:$0xff] %v1224
  %s1291 = smul.u32 0, 512
  %v1292 = vlaneseq
  %v1293 = vshrl.u32 %v1292, 7
  %v1294 = vadd.s32 %v1293, 8
  %v1295 = vadd.s32 %v1293, 16
  %v1296 = vadd.s32 %v1293, 24
  %v1297 = vadd.s32 %v1293, 32
  %v1298 = vadd.s32 %v1293, 40
  %v1299 = vadd.s32 %v1293, 48
  %v1300 = vadd.s32 %v1293, 56
  %v1301 = vadd.s32 %v1293, 64
  %v1302 = vadd.s32 %v1293, 72
  %v1303 = vadd.s32 %v1293, 80
  %v1304 = vadd.s32 %v1293, 88
  %v1305 = vadd.s32 %v1293, 96
  %v1306 = vadd.s32 %v1293, 104
  %v1307 = vadd.s32 %v1293, 112
  %v1308 = vadd.s32 %v1293, 120
  %v1309 = vadd.s32 %v1293, 128
  %v1310 = vadd.s32 %v1293, 136
  %v1311 = vadd.s32 %v1293, 144
  %v1312 = vadd.s32 %v1293, 152
  %v1313 = vadd.s32 %v1293, 160
  %v1314 = vadd.s32 %v1293, 168
  %v1315 = vadd.s32 %v1293, 176
  %v1316 = vadd.s32 %v1293, 184
  %v1317 = vadd.s32 %v1293, 192
  %v1318 = vadd.s32 %v1293, 200
  %v1319 = vadd.s32 %v1293, 208
  %v1320 = vadd.s32 %v1293, 216
  %v1321 = vadd.s32 %v1293, 224
  %v1322 = vadd.s32 %v1293, 232
  %v1323 = vadd.s32 %v1293, 240
  %v1324 = vadd.s32 %v1293, 248
  %v1325 = vadd.s32 %v1293, 256
  %v1326 = vadd.s32 %v1293, 264
  %v1327 = vadd.s32 %v1293, 272
  %v1328 = vadd.s32 %v1293, 280
  %v1329 = vadd.s32 %v1293, 288
  %v1330 = vadd.s32 %v1293, 296
  %v1331 = vadd.s32 %v1293, 304
  %v1332 = vadd.s32 %v1293, 312
  %v1333 = vadd.s32 %v1293, 320
  %v1334 = vadd.s32 %v1293, 328
  %v1335 = vadd.s32 %v1293, 336
  %v1336 = vadd.s32 %v1293, 344
  %v1337 = vadd.s32 %v1293, 352
  %v1338 = vadd.s32 %v1293, 360
  %v1339 = vadd.s32 %v1293, 368
  %v1340 = vadd.s32 %v1293, 376
  %v1341 = vadd.s32 %v1293, 384
  %v1342 = vadd.s32 %v1293, 392
  %v1343 = vadd.s32 %v1293, 400
  %v1344 = vadd.s32 %v1293, 408
  %v1345 = vadd.s32 %v1293, 416
  %v1346 = vadd.s32 %v1293, 424
  %v1347 = vadd.s32 %v1293, 432
  %v1348 = vadd.s32 %v1293, 440
  %v1349 = vadd.s32 %v1293, 448
  %v1350 = vadd.s32 %v1293, 456
  %v1351 = vadd.s32 %v1293, 464
  %v1352 = vadd.s32 %v1293, 472
  %v1353 = vadd.s32 %v1293, 480
  %v1354 = vadd.s32 %v1293, 488
  %v1355 = vadd.s32 %v1293, 496
  %v1356 = vadd.s32 %v1293, 504
  %v1357 = vstv %s1291
  %v1358 = vadd.s32 %v1357, %v1293
  %v1359 = vadd.s32 %v1357, %v1294
  %v1360 = vadd.s32 %v1357, %v1295
  %v1361 = vadd.s32 %v1357, %v1296
  %v1362 = vadd.s32 %v1357, %v1297
  %v1363 = vadd.s32 %v1357, %v1298
  %v1364 = vadd.s32 %v1357, %v1299
  %v1365 = vadd.s32 %v1357, %v1300
  %v1366 = vadd.s32 %v1357, %v1301
  %v1367 = vadd.s32 %v1357, %v1302
  %v1368 = vadd.s32 %v1357, %v1303
  %v1369 = vadd.s32 %v1357, %v1304
  %v1370 = vadd.s32 %v1357, %v1305
  %v1371 = vadd.s32 %v1357, %v1306
  %v1372 = vadd.s32 %v1357, %v1307
  %v1373 = vadd.s32 %v1357, %v1308
  %v1374 = vadd.s32 %v1357, %v1309
  %v1375 = vadd.s32 %v1357, %v1310
  %v1376 = vadd.s32 %v1357, %v1311
  %v1377 = vadd.s32 %v1357, %v1312
  %v1378 = vadd.s32 %v1357, %v1313
  %v1379 = vadd.s32 %v1357, %v1314
  %v1380 = vadd.s32 %v1357, %v1315
  %v1381 = vadd.s32 %v1357, %v1316
  %v1382 = vadd.s32 %v1357, %v1317
  %v1383 = vadd.s32 %v1357, %v1318
  %v1384 = vadd.s32 %v1357, %v1319
  %v1385 = vadd.s32 %v1357, %v1320
  %v1386 = vadd.s32 %v1357, %v1321
  %v1387 = vadd.s32 %v1357, %v1322
  %v1388 = vadd.s32 %v1357, %v1323
  %v1389 = vadd.s32 %v1357, %v1324
  %v1390 = vadd.s32 %v1357, %v1325
  %v1391 = vadd.s32 %v1357, %v1326
  %v1392 = vadd.s32 %v1357, %v1327
  %v1393 = vadd.s32 %v1357, %v1328
  %v1394 = vadd.s32 %v1357, %v1329
  %v1395 = vadd.s32 %v1357, %v1330
  %v1396 = vadd.s32 %v1357, %v1331
  %v1397 = vadd.s32 %v1357, %v1332
  %v1398 = vadd.s32 %v1357, %v1333
  %v1399 = vadd.s32 %v1357, %v1334
  %v1400 = vadd.s32 %v1357, %v1335
  %v1401 = vadd.s32 %v1357, %v1336
  %v1402 = vadd.s32 %v1357, %v1337
  %v1403 = vadd.s32 %v1357, %v1338
  %v1404 = vadd.s32 %v1357, %v1339
  %v1405 = vadd.s32 %v1357, %v1340
  %v1406 = vadd.s32 %v1357, %v1341
  %v1407 = vadd.s32 %v1357, %v1342
  %v1408 = vadd.s32 %v1357, %v1343
  %v1409 = vadd.s32 %v1357, %v1344
  %v1410 = vadd.s32 %v1357, %v1345
  %v1411 = vadd.s32 %v1357, %v1346
  %v1412 = vadd.s32 %v1357, %v1347
  %v1413 = vadd.s32 %v1357, %v1348
  %v1414 = vadd.s32 %v1357, %v1349
  %v1415 = vadd.s32 %v1357, %v1350
  %v1416 = vadd.s32 %v1357, %v1351
  %v1417 = vadd.s32 %v1357, %v1352
  %v1418 = vadd.s32 %v1357, %v1353
  %v1419 = vadd.s32 %v1357, %v1354
  %v1420 = vadd.s32 %v1357, %v1355
  %v1421 = vadd.s32 %v1357, %v1356
  %vm1422 = vcmp.lt.s32.totalorder %v1358, 512
  %vm1423 = vcmp.lt.s32.totalorder %v1359, 512
  %vm1424 = vcmp.lt.s32.totalorder %v1360, 512
  %vm1425 = vcmp.lt.s32.totalorder %v1361, 512
  %vm1426 = vcmp.lt.s32.totalorder %v1362, 512
  %vm1427 = vcmp.lt.s32.totalorder %v1363, 512
  %vm1428 = vcmp.lt.s32.totalorder %v1364, 512
  %vm1429 = vcmp.lt.s32.totalorder %v1365, 512
  %vm1430 = vcmp.lt.s32.totalorder %v1366, 512
  %vm1431 = vcmp.lt.s32.totalorder %v1367, 512
  %vm1432 = vcmp.lt.s32.totalorder %v1368, 512
  %vm1433 = vcmp.lt.s32.totalorder %v1369, 512
  %vm1434 = vcmp.lt.s32.totalorder %v1370, 512
  %vm1435 = vcmp.lt.s32.totalorder %v1371, 512
  %vm1436 = vcmp.lt.s32.totalorder %v1372, 512
  %vm1437 = vcmp.lt.s32.totalorder %v1373, 512
  %vm1438 = vcmp.lt.s32.totalorder %v1374, 512
  %vm1439 = vcmp.lt.s32.totalorder %v1375, 512
  %vm1440 = vcmp.lt.s32.totalorder %v1376, 512
  %vm1441 = vcmp.lt.s32.totalorder %v1377, 512
  %vm1442 = vcmp.lt.s32.totalorder %v1378, 512
  %vm1443 = vcmp.lt.s32.totalorder %v1379, 512
  %vm1444 = vcmp.lt.s32.totalorder %v1380, 512
  %vm1445 = vcmp.lt.s32.totalorder %v1381, 512
  %vm1446 = vcmp.lt.s32.totalorder %v1382, 512
  %vm1447 = vcmp.lt.s32.totalorder %v1383, 512
  %vm1448 = vcmp.lt.s32.totalorder %v1384, 512
  %vm1449 = vcmp.lt.s32.totalorder %v1385, 512
  %vm1450 = vcmp.lt.s32.totalorder %v1386, 512
  %vm1451 = vcmp.lt.s32.totalorder %v1387, 512
  %vm1452 = vcmp.lt.s32.totalorder %v1388, 512
  %vm1453 = vcmp.lt.s32.totalorder %v1389, 512
  %vm1454 = vcmp.lt.s32.totalorder %v1390, 512
  %vm1455 = vcmp.lt.s32.totalorder %v1391, 512
  %vm1456 = vcmp.lt.s32.totalorder %v1392, 512
  %vm1457 = vcmp.lt.s32.totalorder %v1393, 512
  %vm1458 = vcmp.lt.s32.totalorder %v1394, 512
  %vm1459 = vcmp.lt.s32.totalorder %v1395, 512
  %vm1460 = vcmp.lt.s32.totalorder %v1396, 512
  %vm1461 = vcmp.lt.s32.totalorder %v1397, 512
  %vm1462 = vcmp.lt.s32.totalorder %v1398, 512
  %vm1463 = vcmp.lt.s32.totalorder %v1399, 512
  %vm1464 = vcmp.lt.s32.totalorder %v1400, 512
  %vm1465 = vcmp.lt.s32.totalorder %v1401, 512
  %vm1466 = vcmp.lt.s32.totalorder %v1402, 512
  %vm1467 = vcmp.lt.s32.totalorder %v1403, 512
  %vm1468 = vcmp.lt.s32.totalorder %v1404, 512
  %vm1469 = vcmp.lt.s32.totalorder %v1405, 512
  %vm1470 = vcmp.lt.s32.totalorder %v1406, 512
  %vm1471 = vcmp.lt.s32.totalorder %v1407, 512
  %vm1472 = vcmp.lt.s32.totalorder %v1408, 512
  %vm1473 = vcmp.lt.s32.totalorder %v1409, 512
  %vm1474 = vcmp.lt.s32.totalorder %v1410, 512
  %vm1475 = vcmp.lt.s32.totalorder %v1411, 512
  %vm1476 = vcmp.lt.s32.totalorder %v1412, 512
  %vm1477 = vcmp.lt.s32.totalorder %v1413, 512
  %vm1478 = vcmp.lt.s32.totalorder %v1414, 512
  %vm1479 = vcmp.lt.s32.totalorder %v1415, 512
  %vm1480 = vcmp.lt.s32.totalorder %v1416, 512
  %vm1481 = vcmp.lt.s32.totalorder %v1417, 512
  %vm1482 = vcmp.lt.s32.totalorder %v1418, 512
  %vm1483 = vcmp.lt.s32.totalorder %v1419, 512
  %vm1484 = vcmp.lt.s32.totalorder %v1420, 512
  %vm1485 = vcmp.lt.s32.totalorder %v1421, 512
  %v1486 = vsel %vm1422, 1, 0
  %v1487 = vsel %vm1423, 1, 0
  %v1488 = vsel %vm1424, 1, 0
  %v1489 = vsel %vm1425, 1, 0
  %v1490 = vsel %vm1426, 1, 0
  %v1491 = vsel %vm1427, 1, 0
  %v1492 = vsel %vm1428, 1, 0
  %v1493 = vsel %vm1429, 1, 0
  %v1494 = vsel %vm1430, 1, 0
  %v1495 = vsel %vm1431, 1, 0
  %v1496 = vsel %vm1432, 1, 0
  %v1497 = vsel %vm1433, 1, 0
  %v1498 = vsel %vm1434, 1, 0
  %v1499 = vsel %vm1435, 1, 0
  %v1500 = vsel %vm1436, 1, 0
  %v1501 = vsel %vm1437, 1, 0
  %v1502 = vsel %vm1438, 1, 0
  %v1503 = vsel %vm1439, 1, 0
  %v1504 = vsel %vm1440, 1, 0
  %v1505 = vsel %vm1441, 1, 0
  %v1506 = vsel %vm1442, 1, 0
  %v1507 = vsel %vm1443, 1, 0
  %v1508 = vsel %vm1444, 1, 0
  %v1509 = vsel %vm1445, 1, 0
  %v1510 = vsel %vm1446, 1, 0
  %v1511 = vsel %vm1447, 1, 0
  %v1512 = vsel %vm1448, 1, 0
  %v1513 = vsel %vm1449, 1, 0
  %v1514 = vsel %vm1450, 1, 0
  %v1515 = vsel %vm1451, 1, 0
  %v1516 = vsel %vm1452, 1, 0
  %v1517 = vsel %vm1453, 1, 0
  %v1518 = vsel %vm1454, 1, 0
  %v1519 = vsel %vm1455, 1, 0
  %v1520 = vsel %vm1456, 1, 0
  %v1521 = vsel %vm1457, 1, 0
  %v1522 = vsel %vm1458, 1, 0
  %v1523 = vsel %vm1459, 1, 0
  %v1524 = vsel %vm1460, 1, 0
  %v1525 = vsel %vm1461, 1, 0
  %v1526 = vsel %vm1462, 1, 0
  %v1527 = vsel %vm1463, 1, 0
  %v1528 = vsel %vm1464, 1, 0
  %v1529 = vsel %vm1465, 1, 0
  %v1530 = vsel %vm1466, 1, 0
  %v1531 = vsel %vm1467, 1, 0
  %v1532 = vsel %vm1468, 1, 0
  %v1533 = vsel %vm1469, 1, 0
  %v1534 = vsel %vm1470, 1, 0
  %v1535 = vsel %vm1471, 1, 0
  %v1536 = vsel %vm1472, 1, 0
  %v1537 = vsel %vm1473, 1, 0
  %v1538 = vsel %vm1474, 1, 0
  %v1539 = vsel %vm1475, 1, 0
  %v1540 = vsel %vm1476, 1, 0
  %v1541 = vsel %vm1477, 1, 0
  %v1542 = vsel %vm1478, 1, 0
  %v1543 = vsel %vm1479, 1, 0
  %v1544 = vsel %vm1480, 1, 0
  %v1545 = vsel %vm1481, 1, 0
  %v1546 = vsel %vm1482, 1, 0
  %v1547 = vsel %vm1483, 1, 0
  %v1548 = vsel %vm1484, 1, 0
  %v1549 = vsel %vm1485, 1, 0
  %v1550 = vcvt.s32.f32 %v1486
  %v1551 = vcvt.s32.f32 %v1487
  %v1552 = vcvt.s32.f32 %v1488
  %v1553 = vcvt.s32.f32 %v1489
  %v1554 = vcvt.s32.f32 %v1490
  %v1555 = vcvt.s32.f32 %v1491
  %v1556 = vcvt.s32.f32 %v1492
  %v1557 = vcvt.s32.f32 %v1493
  %v1558 = vcvt.s32.f32 %v1494
  %v1559 = vcvt.s32.f32 %v1495
  %v1560 = vcvt.s32.f32 %v1496
  %v1561 = vcvt.s32.f32 %v1497
  %v1562 = vcvt.s32.f32 %v1498
  %v1563 = vcvt.s32.f32 %v1499
  %v1564 = vcvt.s32.f32 %v1500
  %v1565 = vcvt.s32.f32 %v1501
  %v1566 = vcvt.s32.f32 %v1502
  %v1567 = vcvt.s32.f32 %v1503
  %v1568 = vcvt.s32.f32 %v1504
  %v1569 = vcvt.s32.f32 %v1505
  %v1570 = vcvt.s32.f32 %v1506
  %v1571 = vcvt.s32.f32 %v1507
  %v1572 = vcvt.s32.f32 %v1508
  %v1573 = vcvt.s32.f32 %v1509
  %v1574 = vcvt.s32.f32 %v1510
  %v1575 = vcvt.s32.f32 %v1511
  %v1576 = vcvt.s32.f32 %v1512
  %v1577 = vcvt.s32.f32 %v1513
  %v1578 = vcvt.s32.f32 %v1514
  %v1579 = vcvt.s32.f32 %v1515
  %v1580 = vcvt.s32.f32 %v1516
  %v1581 = vcvt.s32.f32 %v1517
  %v1582 = vcvt.s32.f32 %v1518
  %v1583 = vcvt.s32.f32 %v1519
  %v1584 = vcvt.s32.f32 %v1520
  %v1585 = vcvt.s32.f32 %v1521
  %v1586 = vcvt.s32.f32 %v1522
  %v1587 = vcvt.s32.f32 %v1523
  %v1588 = vcvt.s32.f32 %v1524
  %v1589 = vcvt.s32.f32 %v1525
  %v1590 = vcvt.s32.f32 %v1526
  %v1591 = vcvt.s32.f32 %v1527
  %v1592 = vcvt.s32.f32 %v1528
  %v1593 = vcvt.s32.f32 %v1529
  %v1594 = vcvt.s32.f32 %v1530
  %v1595 = vcvt.s32.f32 %v1531
  %v1596 = vcvt.s32.f32 %v1532
  %v1597 = vcvt.s32.f32 %v1533
  %v1598 = vcvt.s32.f32 %v1534
  %v1599 = vcvt.s32.f32 %v1535
  %v1600 = vcvt.s32.f32 %v1536
  %v1601 = vcvt.s32.f32 %v1537
  %v1602 = vcvt.s32.f32 %v1538
  %v1603 = vcvt.s32.f32 %v1539
  %v1604 = vcvt.s32.f32 %v1540
  %v1605 = vcvt.s32.f32 %v1541
  %v1606 = vcvt.s32.f32 %v1542
  %v1607 = vcvt.s32.f32 %v1543
  %v1608 = vcvt.s32.f32 %v1544
  %v1609 = vcvt.s32.f32 %v1545
  %v1610 = vcvt.s32.f32 %v1546
  %v1611 = vcvt.s32.f32 %v1547
  %v1612 = vcvt.s32.f32 %v1548
  %v1613 = vcvt.s32.f32 %v1549
  %v1614 = vmul.f32 %v973, %v1550
  %v1615 = vmul.f32 %v976, %v1551
  %v1616 = vmul.f32 %v981, %v1552
  %v1617 = vmul.f32 %v984, %v1553
  %v1618 = vmul.f32 %v989, %v1554
  %v1619 = vmul.f32 %v992, %v1555
  %v1620 = vmul.f32 %v997, %v1556
  %v1621 = vmul.f32 %v1000, %v1557
  %v1622 = vmul.f32 %v1005, %v1558
  %v1623 = vmul.f32 %v1008, %v1559
  %v1624 = vmul.f32 %v1013, %v1560
  %v1625 = vmul.f32 %v1016, %v1561
  %v1626 = vmul.f32 %v1021, %v1562
  %v1627 = vmul.f32 %v1024, %v1563
  %v1628 = vmul.f32 %v1029, %v1564
  %v1629 = vmul.f32 %v1032, %v1565
  %v1630 = vmul.f32 %v1037, %v1566
  %v1631 = vmul.f32 %v1040, %v1567
  %v1632 = vmul.f32 %v1045, %v1568
  %v1633 = vmul.f32 %v1048, %v1569
  %v1634 = vmul.f32 %v1053, %v1570
  %v1635 = vmul.f32 %v1056, %v1571
  %v1636 = vmul.f32 %v1061, %v1572
  %v1637 = vmul.f32 %v1064, %v1573
  %v1638 = vmul.f32 %v1069, %v1574
  %v1639 = vmul.f32 %v1072, %v1575
  %v1640 = vmul.f32 %v1077, %v1576
  %v1641 = vmul.f32 %v1080, %v1577
  %v1642 = vmul.f32 %v1085, %v1578
  %v1643 = vmul.f32 %v1088, %v1579
  %v1644 = vmul.f32 %v1093, %v1580
  %v1645 = vmul.f32 %v1096, %v1581
  %v1646 = vmul.f32 %v1101, %v1582
  %v1647 = vmul.f32 %v1104, %v1583
  %v1648 = vmul.f32 %v1109, %v1584
  %v1649 = vmul.f32 %v1112, %v1585
  %v1650 = vmul.f32 %v1117, %v1586
  %v1651 = vmul.f32 %v1120, %v1587
  %v1652 = vmul.f32 %v1125, %v1588
  %v1653 = vmul.f32 %v1128, %v1589
  %v1654 = vmul.f32 %v1133, %v1590
  %v1655 = vmul.f32 %v1136, %v1591
  %v1656 = vmul.f32 %v1141, %v1592
  %v1657 = vmul.f32 %v1144, %v1593
  %v1658 = vmul.f32 %v1149, %v1594
  %v1659 = vmul.f32 %v1152, %v1595
  %v1660 = vmul.f32 %v1157, %v1596
  %v1661 = vmul.f32 %v1160, %v1597
  %v1662 = vmul.f32 %v1165, %v1598
  %v1663 = vmul.f32 %v1168, %v1599
  %v1664 = vmul.f32 %v1173, %v1600
  %v1665 = vmul.f32 %v1176, %v1601
  %v1666 = vmul.f32 %v1181, %v1602
  %v1667 = vmul.f32 %v1184, %v1603
  %v1668 = vmul.f32 %v1189, %v1604
  %v1669 = vmul.f32 %v1192, %v1605
  %v1670 = vmul.f32 %v1197, %v1606
  %v1671 = vmul.f32 %v1200, %v1607
  %v1672 = vmul.f32 %v1205, %v1608
  %v1673 = vmul.f32 %v1208, %v1609
  %v1674 = vmul.f32 %v1213, %v1610
  %v1675 = vmul.f32 %v1216, %v1611
  %v1676 = vmul.f32 %v1221, %v1612
  %v1677 = vmul.f32 %v1224, %v1613
  %v1678 = vld [vmem:[#allocation2] sm:$0x1]
  %v1679 = vadd.f32 %v1614, %v1615
  %v1680 = vadd.f32 %v1679, %v1616
  %v1681 = vadd.f32 %v1680, %v1617
  %v1682 = vadd.f32 %v1681, %v1618
  %v1683 = vadd.f32 %v1682, %v1619
  %v1684 = vadd.f32 %v1683, %v1620
  %v1685 = vadd.f32 %v1684, %v1621
  %v1686 = vadd.f32 %v1685, %v1622
  %v1687 = vadd.f32 %v1686, %v1623
  %v1688 = vadd.f32 %v1687, %v1624
  %v1689 = vadd.f32 %v1688, %v1625
  %v1690 = vadd.f32 %v1689, %v1626
  %v1691 = vadd.f32 %v1690, %v1627
  %v1692 = vadd.f32 %v1691, %v1628
  %v1693 = vadd.f32 %v1692, %v1629
  %v1694 = vadd.f32 %v1693, %v1630
  %v1695 = vadd.f32 %v1694, %v1631
  %v1696 = vadd.f32 %v1695, %v1632
  %v1697 = vadd.f32 %v1696, %v1633
  %v1698 = vadd.f32 %v1697, %v1634
  %v1699 = vadd.f32 %v1698, %v1635
  %v1700 = vadd.f32 %v1699, %v1636
  %v1701 = vadd.f32 %v1700, %v1637
  %v1702 = vadd.f32 %v1701, %v1638
  %v1703 = vadd.f32 %v1702, %v1639
  %v1704 = vadd.f32 %v1703, %v1640
  %v1705 = vadd.f32 %v1704, %v1641
  %v1706 = vadd.f32 %v1705, %v1642
  %v1707 = vadd.f32 %v1706, %v1643
  %v1708 = vadd.f32 %v1707, %v1644
  %v1709 = vadd.f32 %v1708, %v1645
  %v1710 = vadd.f32 %v1709, %v1646
  %v1711 = vadd.f32 %v1710, %v1647
  %v1712 = vadd.f32 %v1711, %v1648
  %v1713 = vadd.f32 %v1712, %v1649
  %v1714 = vadd.f32 %v1713, %v1650
  %v1715 = vadd.f32 %v1714, %v1651
  %v1716 = vadd.f32 %v1715, %v1652
  %v1717 = vadd.f32 %v1716, %v1653
  %v1718 = vadd.f32 %v1717, %v1654
  %v1719 = vadd.f32 %v1718, %v1655
  %v1720 = vadd.f32 %v1719, %v1656
  %v1721 = vadd.f32 %v1720, %v1657
  %v1722 = vadd.f32 %v1721, %v1658
  %v1723 = vadd.f32 %v1722, %v1659
  %v1724 = vadd.f32 %v1723, %v1660
  %v1725 = vadd.f32 %v1724, %v1661
  %v1726 = vadd.f32 %v1725, %v1662
  %v1727 = vadd.f32 %v1726, %v1663
  %v1728 = vadd.f32 %v1727, %v1664
  %v1729 = vadd.f32 %v1728, %v1665
  %v1730 = vadd.f32 %v1729, %v1666
  %v1731 = vadd.f32 %v1730, %v1667
  %v1732 = vadd.f32 %v1731, %v1668
  %v1733 = vadd.f32 %v1732, %v1669
  %v1734 = vadd.f32 %v1733, %v1670
  %v1735 = vadd.f32 %v1734, %v1671
  %v1736 = vadd.f32 %v1735, %v1672
  %v1737 = vadd.f32 %v1736, %v1673
  %v1738 = vadd.f32 %v1737, %v1674
  %v1739 = vadd.f32 %v1738, %v1675
  %v1740 = vadd.f32 %v1739, %v1676
  %v1741 = vadd.f32 %v1740, %v1677
  %v1742 = vrot.slane %v1741, 4
  %v1743 = vadd.f32 %v1741, %v1742
  %v1744 = vrot.slane %v1743, 2
  %v1745 = vadd.f32 %v1743, %v1744
  %v1746 = vrot.slane %v1745, 1
  %v1747 = vadd.f32 %v1745, %v1746
  %v1748 = vadd.f32 %v1678, %v1747
  %1749 = vst [vmem:[#allocation2] sm:$0x1] %v1748
  %v1750 = vld [vmem:[#allocation3] sm:$0x1]
  %v1751 = vmul.f32 %v1614, %v1614
  %v1752 = vmul.f32 %v1615, %v1615
  %v1753 = vmul.f32 %v1616, %v1616
  %v1754 = vmul.f32 %v1617, %v1617
  %v1755 = vmul.f32 %v1618, %v1618
  %v1756 = vmul.f32 %v1619, %v1619
  %v1757 = vmul.f32 %v1620, %v1620
  %v1758 = vmul.f32 %v1621, %v1621
  %v1759 = vmul.f32 %v1622, %v1622
  %v1760 = vmul.f32 %v1623, %v1623
  %v1761 = vmul.f32 %v1624, %v1624
  %v1762 = vmul.f32 %v1625, %v1625
  %v1763 = vmul.f32 %v1626, %v1626
  %v1764 = vmul.f32 %v1627, %v1627
  %v1765 = vmul.f32 %v1628, %v1628
  %v1766 = vmul.f32 %v1629, %v1629
  %v1767 = vmul.f32 %v1630, %v1630
  %v1768 = vmul.f32 %v1631, %v1631
  %v1769 = vmul.f32 %v1632, %v1632
  %v1770 = vmul.f32 %v1633, %v1633
  %v1771 = vmul.f32 %v1634, %v1634
  %v1772 = vmul.f32 %v1635, %v1635
  %v1773 = vmul.f32 %v1636, %v1636
  %v1774 = vmul.f32 %v1637, %v1637
  %v1775 = vmul.f32 %v1638, %v1638
  %v1776 = vmul.f32 %v1639, %v1639
  %v1777 = vmul.f32 %v1640, %v1640
  %v1778 = vmul.f32 %v1641, %v1641
  %v1779 = vmul.f32 %v1642, %v1642
  %v1780 = vmul.f32 %v1643, %v1643
  %v1781 = vmul.f32 %v1644, %v1644
  %v1782 = vmul.f32 %v1645, %v1645
  %v1783 = vmul.f32 %v1646, %v1646
  %v1784 = vmul.f32 %v1647, %v1647
  %v1785 = vmul.f32 %v1648, %v1648
  %v1786 = vmul.f32 %v1649, %v1649
  %v1787 = vmul.f32 %v1650, %v1650
  %v1788 = vmul.f32 %v1651, %v1651
  %v1789 = vmul.f32 %v1652, %v1652
  %v1790 = vmul.f32 %v1653, %v1653
  %v1791 = vmul.f32 %v1654, %v1654
  %v1792 = vmul.f32 %v1655, %v1655
  %v1793 = vmul.f32 %v1656, %v1656
  %v1794 = vmul.f32 %v1657, %v1657
  %v1795 = vmul.f32 %v1658, %v1658
  %v1796 = vmul.f32 %v1659, %v1659
  %v1797 = vmul.f32 %v1660, %v1660
  %v1798 = vmul.f32 %v1661, %v1661
  %v1799 = vmul.f32 %v1662, %v1662
  %v1800 = vmul.f32 %v1663, %v1663
  %v1801 = vmul.f32 %v1664, %v1664
  %v1802 = vmul.f32 %v1665, %v1665
  %v1803 = vmul.f32 %v1666, %v1666
  %v1804 = vmul.f32 %v1667, %v1667
  %v1805 = vmul.f32 %v1668, %v1668
  %v1806 = vmul.f32 %v1669, %v1669
  %v1807 = vmul.f32 %v1670, %v1670
  %v1808 = vmul.f32 %v1671, %v1671
  %v1809 = vmul.f32 %v1672, %v1672
  %v1810 = vmul.f32 %v1673, %v1673
  %v1811 = vmul.f32 %v1674, %v1674
  %v1812 = vmul.f32 %v1675, %v1675
  %v1813 = vmul.f32 %v1676, %v1676
  %v1814 = vmul.f32 %v1677, %v1677
  %v1815 = vadd.f32 %v1751, %v1752
  %v1816 = vadd.f32 %v1815, %v1753
  %v1817 = vadd.f32 %v1816, %v1754
  %v1818 = vadd.f32 %v1817, %v1755
  %v1819 = vadd.f32 %v1818, %v1756
  %v1820 = vadd.f32 %v1819, %v1757
  %v1821 = vadd.f32 %v1820, %v1758
  %v1822 = vadd.f32 %v1821, %v1759
  %v1823 = vadd.f32 %v1822, %v1760
  %v1824 = vadd.f32 %v1823, %v1761
  %v1825 = vadd.f32 %v1824, %v1762
  %v1826 = vadd.f32 %v1825, %v1763
  %v1827 = vadd.f32 %v1826, %v1764
  %v1828 = vadd.f32 %v1827, %v1765
  %v1829 = vadd.f32 %v1828, %v1766
  %v1830 = vadd.f32 %v1829, %v1767
  %v1831 = vadd.f32 %v1830, %v1768
  %v1832 = vadd.f32 %v1831, %v1769
  %v1833 = vadd.f32 %v1832, %v1770
  %v1834 = vadd.f32 %v1833, %v1771
  %v1835 = vadd.f32 %v1834, %v1772
  %v1836 = vadd.f32 %v1835, %v1773
  %v1837 = vadd.f32 %v1836, %v1774
  %v1838 = vadd.f32 %v1837, %v1775
  %v1839 = vadd.f32 %v1838, %v1776
  %v1840 = vadd.f32 %v1839, %v1777
  %v1841 = vadd.f32 %v1840, %v1778
  %v1842 = vadd.f32 %v1841, %v1779
  %v1843 = vadd.f32 %v1842, %v1780
  %v1844 = vadd.f32 %v1843, %v1781
  %v1845 = vadd.f32 %v1844, %v1782
  %v1846 = vadd.f32 %v1845, %v1783
  %v1847 = vadd.f32 %v1846, %v1784
  %v1848 = vadd.f32 %v1847, %v1785
  %v1849 = vadd.f32 %v1848, %v1786
  %v1850 = vadd.f32 %v1849, %v1787
  %v1851 = vadd.f32 %v1850, %v1788
  %v1852 = vadd.f32 %v1851, %v1789
  %v1853 = vadd.f32 %v1852, %v1790
  %v1854 = vadd.f32 %v1853, %v1791
  %v1855 = vadd.f32 %v1854, %v1792
  %v1856 = vadd.f32 %v1855, %v1793
  %v1857 = vadd.f32 %v1856, %v1794
  %v1858 = vadd.f32 %v1857, %v1795
  %v1859 = vadd.f32 %v1858, %v1796
  %v1860 = vadd.f32 %v1859, %v1797
  %v1861 = vadd.f32 %v1860, %v1798
  %v1862 = vadd.f32 %v1861, %v1799
  %v1863 = vadd.f32 %v1862, %v1800
  %v1864 = vadd.f32 %v1863, %v1801
  %v1865 = vadd.f32 %v1864, %v1802
  %v1866 = vadd.f32 %v1865, %v1803
  %v1867 = vadd.f32 %v1866, %v1804
  %v1868 = vadd.f32 %v1867, %v1805
  %v1869 = vadd.f32 %v1868, %v1806
  %v1870 = vadd.f32 %v1869, %v1807
  %v1871 = vadd.f32 %v1870, %v1808
  %v1872 = vadd.f32 %v1871, %v1809
  %v1873 = vadd.f32 %v1872, %v1810
  %v1874 = vadd.f32 %v1873, %v1811
  %v1875 = vadd.f32 %v1874, %v1812
  %v1876 = vadd.f32 %v1875, %v1813
  %v1877 = vadd.f32 %v1876, %v1814
  %v1878 = vrot.slane %v1877, 4
  %v1879 = vadd.f32 %v1877, %v1878
  %v1880 = vrot.slane %v1879, 2
  %v1881 = vadd.f32 %v1879, %v1880
  %v1882 = vrot.slane %v1881, 1
  %v1883 = vadd.f32 %v1881, %v1882
  %v1884 = vadd.f32 %v1750, %v1883
  %1885 = vst [vmem:[#allocation3] sm:$0x1] %v1884
  // Predicated region
  $region22: #{pixel_discriminator_fwd.2} parent=0 // pred_check
    %p1886 = pneg %p21
  $region23: #{pixel_discriminator_fwd.2} parent=0 // pred_check_branch
    %1888 = sbr.rel (%p1886) target = $region25
  $region24: #{pixel_discriminator_fwd.2} parent=0 // pred_region
    %v1889 = vld [vmem:[#allocation2] sm:$0x1]
    %1890 = vst [vmem:[%s5] sm:$0x1] %v1889
    %v1891 = vld [vmem:[#allocation3] sm:$0x1]
    %1892 = vst [vmem:[%s6] sm:$0x1] %v1891
  $region25: #{pixel_discriminator_fwd.2} parent=0 // pred_fallthru
    _
  // Predicated region
  $region26: #{pixel_discriminator_fwd.2} parent=0 // pred_check
    _
  $region27: #{pixel_discriminator_fwd.2} parent=0 // pred_check_branch
    %1894 = sbr.rel (0) target = $region29
  $region28: #{pixel_discriminator_fwd.2} parent=0 // pred_region
    _
  $region29: #{pixel_discriminator_fwd.2} parent=0 // pred_fallthru
    _
  // Predicated region
  $region30: #{pixel_discriminator_fwd.2} parent=0 // pred_check
    _
  $region31: #{pixel_discriminator_fwd.2} parent=0 // pred_check_branch
    %1896 = sbr.rel (0) target = $region33
  $region32: #{pixel_discriminator_fwd.2} parent=0 // pred_region
    _
  $region33: #{pixel_discriminator_fwd.2} parent=0 // pred_fallthru
    _
  // Predicated region
  $region34: #{pixel_discriminator_fwd.2} parent=0 // pred_check
    _
  $region35: #{pixel_discriminator_fwd.2} parent=0 // pred_check_branch
    %1898 = sbr.rel (0) target = $region37
  $region36: #{pixel_discriminator_fwd.2} parent=0 // pred_region
    _
  $region37: #{pixel_discriminator_fwd.2} parent=0 // pred_fallthru
    _
  // Predicated region
  $region38: #{pixel_discriminator_fwd.2} parent=0 // pred_check
    _
  $region39: #{pixel_discriminator_fwd.2} parent=0 // pred_check_branch
    %1900 = sbr.rel (0) target = $region41
  $region40: #{pixel_discriminator_fwd.2} parent=0 // pred_region
    _
  $region41: #{pixel_discriminator_fwd.2} parent=0 // pred_fallthru
    _
  // Predicated region
  $region42: #{pixel_discriminator_fwd.2} parent=0 // pred_check
    _
  $region43: #{pixel_discriminator_fwd.2} parent=0 // pred_check_branch
    %1902 = sbr.rel (0) target = $region45
  $region44: #{pixel_discriminator_fwd.2} parent=0 // pred_region
    _
  $region45: #{pixel_discriminator_fwd.2} parent=0 // pred_fallthru
    _
  // Predicated region
  $region46: #{pixel_discriminator_fwd.2} parent=0 // pred_check
    _
  $region47: #{pixel_discriminator_fwd.2} parent=0 // pred_check_branch
    %1904 = sbr.rel (0) target = $region49
  $region48: #{pixel_discriminator_fwd.2} parent=0 // pred_region
    _
  $region49: #{pixel_discriminator_fwd.2} parent=0 // pred_fallthru
    _

</llo_original>
